<compile_context>
chip_gen: v5e
topology: v5e:2x2
jax: 0.10.0
libtpu: 0.0.40
codegen_flags: <defaults>
</compile_context>

<pallas_src>
import functools
import math

import numpy as np

import jax
import jax.numpy as jnp
from jax import lax
from jax.experimental import pallas as pl
from jax.experimental.pallas import tpu as pltpu

# ---------------------------------------------------------------------------
# Config (mirrors the PyTorch constants; test shapes kept small)
# ---------------------------------------------------------------------------
N_EMBD = 64
N_HEADS = 8
HEAD_SIZE = N_EMBD // N_HEADS          # 8
N_LAYERS = 6
BLOCK_SIZE = 256                        # positional table length (block_size)
N_VOCAB = 32                            # synthetic char vocab
FFN_HIDDEN = 256
LN_EPS = 1e-5
LOGITS_PAD = 128                        # lane-dense logits store (padded cols)


def _use_bf16_exp():
    """bf16 EUP exp exists on v6e/v7x; keep f32 exp on v5e and older."""
    try:
        kind = jax.devices()[0].device_kind.lower()
    except Exception:
        return False
    return ("v6" in kind) or ("v7" in kind)


def _row_tile(m, cap=512):
    """Largest multiple-of-8 divisor of m, capped so the grid has >= 2 steps
    whenever possible (keeps both v7x TensorCores busy)."""
    limit = min(cap, m if m < 16 else m // 2)
    start = limit - (limit % 8)
    for t in range(start, 0, -8):
        if m % t == 0:
            return t
    return m


# ---------------------------------------------------------------------------
# Kernel A: fused per-batch attention (QKV matmul + per-head softmax attn)
# Output layout (B, H, T, hs): the reference's scrambled concat is then a
# zero-copy reshape to (B, T, H*hs) in the wrapper.
# ---------------------------------------------------------------------------
def _attn_heads_kernel(x_ref, wqkv_ref, o_ref, *, n_heads, head_size, exp_bf16):
    hh = n_heads * head_size
    scale = 1.0 / math.sqrt(head_size)
    x = x_ref[0].astype(jnp.bfloat16)                                  # (T, D)
    # One lane-dense QKV matmul: (T, D) @ (D, 3*H*hs) -> f32 accumulation.
    qkv = jnp.dot(x, wqkv_ref[...], preferred_element_type=jnp.float32)
    q = (qkv[:, 0:hh] * scale).astype(jnp.bfloat16)        # scale in f32, then cast
    k = qkv[:, hh:2 * hh].astype(jnp.bfloat16)
    v = qkv[:, 2 * hh:3 * hh].astype(jnp.bfloat16)
    kT = k.T                                               # one XLU transpose, hoisted
    for h in range(n_heads):                               # static unroll (H=8)
        sl = slice(h * head_size, (h + 1) * head_size)
        # scores = q_h @ k_h^T in canonical (M,K)x(K,N) form, K = head_size.
        s = jnp.dot(q[:, sl], kT[sl, :], preferred_element_type=jnp.float32)  # (T, T)
        # NOTE: reference discards the masked_fill result -> no causal mask.
        s = s - jnp.max(s, axis=-1, keepdims=True)
        if exp_bf16:
            p = jnp.exp(s.astype(jnp.bfloat16))            # EUP bf16 path (v6e/v7x)
            denom = jnp.sum(p.astype(jnp.float32), axis=-1, keepdims=True)
            attn = p * pl.reciprocal(denom, approx=True).astype(jnp.bfloat16)
        else:
            p = jnp.exp(s)                                 # f32 exp (v5e & older)
            denom = jnp.sum(p, axis=-1, keepdims=True)
            attn = (p * pl.reciprocal(denom, approx=True)).astype(jnp.bfloat16)
        out_h = jnp.dot(attn, v[:, sl], preferred_element_type=jnp.float32)    # (T, hs)
        # Store immediately so per-head temporaries die between heads.
        o_ref[0, h, :, :] = out_h.astype(o_ref.dtype)


def attention_heads_pallas(x, wqkv, exp_bf16):
    """x: (B, T, D) f32; wqkv: (D, 3*H*hs) bf16 -> (B, H, T, hs) bf16."""
    B, T, D = x.shape
    three_hh = wqkv.shape[1]
    flops = int(B * (2 * T * D * three_hh + N_HEADS * 4 * T * T * HEAD_SIZE))
    transc = int(B * N_HEADS * T * T)
    byts = int(4 * B * T * D + 2 * B * T * (three_hh // 3) + 2 * D * three_hh)
    return pl.pallas_call(
        functools.partial(_attn_heads_kernel, n_heads=N_HEADS,
                          head_size=HEAD_SIZE, exp_bf16=exp_bf16),
        out_shape=jax.ShapeDtypeStruct((B, N_HEADS, T, HEAD_SIZE), jnp.bfloat16),
        grid=(B,),
        in_specs=[
            pl.BlockSpec((1, T, D), lambda b: (b, 0, 0)),
            pl.BlockSpec((D, three_hh), lambda b: (0, 0)),
        ],
        out_specs=pl.BlockSpec((1, N_HEADS, T, HEAD_SIZE), lambda b: (b, 0, 0, 0)),
        compiler_params=pltpu.CompilerParams(dimension_semantics=("parallel",)),
        cost_estimate=pl.CostEstimate(flops=flops, transcendentals=transc,
                                      bytes_accessed=byts),
    )(x, wqkv)


# ---------------------------------------------------------------------------
# Kernel B: fused rest-of-layer
#   proj + bias + residual + LN1 + FFN(Conv1d k=1 -> ReLU -> Conv1d k=1)
#   + residual + LN2, row-tiled over M = B*T.
# ---------------------------------------------------------------------------
def _layer_rest_kernel(scr_ref, x_ref, w_o_ref, b_o_ref, g1_ref, beta1_ref,
                       w1_ref, b1_ref, w2_ref, b2_ref, g2_ref, beta2_ref,
                       o_ref, *, eps):
    x = x_ref[...]                                                     # (tm, D) f32
    scr = scr_ref[...].astype(jnp.bfloat16)
    # MultiHeadAttention output projection + residual + LayerNorm.
    proj = jnp.dot(scr, w_o_ref[...], preferred_element_type=jnp.float32) + b_o_ref[...]
    v = proj + x
    mean = jnp.mean(v, axis=-1, keepdims=True)
    c = v - mean
    var = jnp.mean(c * c, axis=-1, keepdims=True)
    a = c * lax.rsqrt(var + eps) * g1_ref[...] + beta1_ref[...]        # LN1 out (f32)
    # FeedForward (pointwise convs) + residual + LayerNorm.
    h = jnp.dot(a.astype(jnp.bfloat16), w1_ref[...],
                preferred_element_type=jnp.float32) + b1_ref[...]
    h = jnp.maximum(h, 0.0)
    y = jnp.dot(h.astype(jnp.bfloat16), w2_ref[...],
                preferred_element_type=jnp.float32) + b2_ref[...]
    v2 = y + a
    mean2 = jnp.mean(v2, axis=-1, keepdims=True)
    c2 = v2 - mean2
    var2 = jnp.mean(c2 * c2, axis=-1, keepdims=True)
    o_ref[...] = (c2 * lax.rsqrt(var2 + eps) * g2_ref[...] + beta2_ref[...]
                  ).astype(o_ref.dtype)


def layer_rest_pallas(scr, x, w_o, b_o, g1, beta1, w1, b1, w2, b2, g2, beta2,
                      eps=LN_EPS):
    M, D = x.shape
    HID = w1.shape[1]
    tm = _row_tile(M)
    row = lambda i: (i, 0)
    const = lambda i: (0, 0)
    flops = int(2 * M * D * D + 4 * M * D * HID)
    byts = int(2 * M * D + 4 * M * D * 2 + 2 * (D * D + 2 * D * HID))
    return pl.pallas_call(
        functools.partial(_layer_rest_kernel, eps=eps),
        out_shape=jax.ShapeDtypeStruct((M, D), jnp.float32),
        grid=(M // tm,),
        in_specs=[
            pl.BlockSpec((tm, D), row),          # scrambled attention (bf16)
            pl.BlockSpec((tm, D), row),          # residual x (f32)
            pl.BlockSpec((D, D), const),         # w_o
            pl.BlockSpec((1, D), const),         # b_o
            pl.BlockSpec((1, D), const),         # ln1 gamma
            pl.BlockSpec((1, D), const),         # ln1 beta
            pl.BlockSpec((D, HID), const),       # w1 (Conv1d 64->256, k=1)
            pl.BlockSpec((1, HID), const),       # b1
            pl.BlockSpec((HID, D), const),       # w2 (Conv1d 256->64, k=1)
            pl.BlockSpec((1, D), const),         # b2
            pl.BlockSpec((1, D), const),         # ln2 gamma
            pl.BlockSpec((1, D), const),         # ln2 beta
        ],
        out_specs=pl.BlockSpec((tm, D), row),
        compiler_params=pltpu.CompilerParams(dimension_semantics=("parallel",)),
        cost_estimate=pl.CostEstimate(flops=flops, transcendentals=0,
                                      bytes_accessed=byts),
    )(scr, x, w_o, b_o.reshape(1, D), g1.reshape(1, D), beta1.reshape(1, D),
      w1, b1.reshape(1, HID), w2, b2.reshape(1, D),
      g2.reshape(1, D), beta2.reshape(1, D))


# ---------------------------------------------------------------------------
# Kernel C: bias-free logits matmul, lane-dense (padded to 128 output lanes)
# ---------------------------------------------------------------------------
def _logits_kernel(x_ref, w_ref, o_ref):
    o_ref[...] = jnp.dot(x_ref[...].astype(jnp.bfloat16), w_ref[...],
                         preferred_element_type=jnp.float32).astype(o_ref.dtype)


def logits_pallas(x, w_pad):
    M, K = x.shape
    NP = w_pad.shape[1]
    tm = _row_tile(M)
    return pl.pallas_call(
        _logits_kernel,
        out_shape=jax.ShapeDtypeStruct((M, NP), jnp.float32),
        grid=(M // tm,),
        in_specs=[pl.BlockSpec((tm, K), lambda i: (i, 0)),
                  pl.BlockSpec((K, NP), lambda i: (0, 0))],
        out_specs=pl.BlockSpec((tm, NP), lambda i: (i, 0)),
        compiler_params=pltpu.CompilerParams(dimension_semantics=("parallel",)),
    )(x, w_pad)


# ---------------------------------------------------------------------------
# Model glue (plain JAX: embedding gather, free scrambled-concat reshape)
# ---------------------------------------------------------------------------
def sinusoid_table(n_position, d_model):
    pos = np.arange(n_position, dtype=np.float64)[:, None]
    hid = np.arange(d_model)[None, :]
    angle = pos / np.power(10000.0, 2.0 * (hid // 2) / d_model)
    table = np.array(angle)
    table[:, 0::2] = np.sin(table[:, 0::2])
    table[:, 1::2] = np.cos(table[:, 1::2])
    return jnp.asarray(table, dtype=jnp.float32)


def init_params(key):
    keys = jax.random.split(key, 2 + N_LAYERS)

    def nrm(k, shape):
        return 0.02 * jax.random.normal(k, shape, jnp.float32)

    w_out = nrm(keys[1], (N_EMBD, N_VOCAB))                 # Linear(64 -> n_vocab), bias=False
    w_out_pad = jnp.pad(w_out, ((0, 0), (0, LOGITS_PAD - N_VOCAB)))

    params = {
        "emb": nrm(keys[0], (N_VOCAB, N_EMBD)),
        "pos": sinusoid_table(BLOCK_SIZE + 1, N_EMBD),
        "w_out_pad": w_out_pad.astype(jnp.bfloat16),
        "layers": [],
    }

    def stack_heads(w):  # (H, D, hs) -> (D, H*hs), head-major columns
        return jnp.transpose(w, (1, 0, 2)).reshape(N_EMBD, N_HEADS * HEAD_SIZE)

    for l in range(N_LAYERS):
        lk = jax.random.split(keys[2 + l], 6)
        wq = nrm(lk[0], (N_HEADS, N_EMBD, HEAD_SIZE))
        wk = nrm(lk[1], (N_HEADS, N_EMBD, HEAD_SIZE))
        wv = nrm(lk[2], (N_HEADS, N_EMBD, HEAD_SIZE))
        wqkv = jnp.concatenate([stack_heads(wq), stack_heads(wk), stack_heads(wv)],
                               axis=1)                        # (D, 3*H*hs)
        params["layers"].append(dict(
            wqkv=wqkv.astype(jnp.bfloat16),
            w_o=nrm(lk[3], (N_EMBD, N_EMBD)).astype(jnp.bfloat16),
            b_o=jnp.zeros((N_EMBD,), jnp.float32),
            ln1_g=jnp.ones((N_EMBD,), jnp.float32),
            ln1_b=jnp.zeros((N_EMBD,), jnp.float32),
            w1=nrm(lk[4], (N_EMBD, FFN_HIDDEN)).astype(jnp.bfloat16),   # Conv1d(64->256, k=1)
            b1=jnp.zeros((FFN_HIDDEN,), jnp.float32),
            w2=nrm(lk[5], (FFN_HIDDEN, N_EMBD)).astype(jnp.bfloat16),   # Conv1d(256->64, k=1)
            b2=jnp.zeros((N_EMBD,), jnp.float32),
            ln2_g=jnp.ones((N_EMBD,), jnp.float32),
            ln2_b=jnp.zeros((N_EMBD,), jnp.float32),
        ))
    return params


def transformer_block(p, x, exp_bf16):
    B, T, D = x.shape
    attn = attention_heads_pallas(x, p["wqkv"], exp_bf16)    # (B, H, T, hs) bf16
    # Reference's stack/permute/transpose/view == row-major reshape of the
    # (B, H, T, hs) tensor into (B, T, H*hs): zero-copy here.
    scr = attn.reshape(B, T, D)
    out = layer_rest_pallas(
        scr.reshape(B * T, D), x.reshape(B * T, D),
        p["w_o"], p["b_o"], p["ln1_g"], p["ln1_b"],
        p["w1"], p["b1"], p["w2"], p["b2"], p["ln2_g"], p["ln2_b"])
    return out.reshape(B, T, D)


def transformer_forward(params, tokens, labels=None, *, exp_bf16=False):
    """tokens: (batch, context) int32 -> (logits (B, T, n_vocab), loss=None)."""
    B, T = tokens.shape
    x = params["emb"][tokens] + params["pos"][:T][None, :, :]
    for lp in params["layers"]:
        x = transformer_block(lp, x, exp_bf16)
    logits = logits_pallas(x.reshape(B * T, N_EMBD), params["w_out_pad"])
    logits = logits[:, :N_VOCAB].reshape(B, T, N_VOCAB)
    # TODO(synk): labels/cross-entropy branch and autoregressive generate()
    # are not implemented (forward with labels=None returns loss=None).
    return logits, None


# ---------------------------------------------------------------------------
if __name__ == "__main__":
    key = jax.random.PRNGKey(0)
    pkey, dkey = jax.random.split(key)
    params = init_params(pkey)

    B, T = 2, 8          # small (batch, context); context <= block_size
    tokens = jax.random.randint(dkey, (B, T), 0, N_VOCAB, dtype=jnp.int32)

    fwd = jax.jit(functools.partial(transformer_forward, exp_bf16=_use_bf16_exp()))
    logits, loss = fwd(params, tokens)
    logits = jax.block_until_ready(logits)

    assert logits.shape == (B, T, N_VOCAB)
    assert logits.dtype == jnp.float32
    assert bool(jnp.all(jnp.isfinite(logits)))
    assert loss is None
    print("KERNEL_OK")
</pallas_src>

<mosaic_0001>
module attributes {stable_mosaic.version = 11 : i64} {
  func.func @_layer_rest_kernel(%arg0: i32, %arg1: memref<8x64xbf16, #tpu.memory_space<vmem>>, %arg2: memref<8x64xf32, #tpu.memory_space<vmem>>, %arg3: memref<64x64xbf16, #tpu.memory_space<vmem>>, %arg4: memref<1x64xf32, #tpu.memory_space<vmem>>, %arg5: memref<1x64xf32, #tpu.memory_space<vmem>>, %arg6: memref<1x64xf32, #tpu.memory_space<vmem>>, %arg7: memref<64x256xbf16, #tpu.memory_space<vmem>>, %arg8: memref<1x256xf32, #tpu.memory_space<vmem>>, %arg9: memref<256x64xbf16, #tpu.memory_space<vmem>>, %arg10: memref<1x64xf32, #tpu.memory_space<vmem>>, %arg11: memref<1x64xf32, #tpu.memory_space<vmem>>, %arg12: memref<1x64xf32, #tpu.memory_space<vmem>>, %arg13: memref<8x64xf32, #tpu.memory_space<vmem>>) attributes {dimension_semantics = [#tpu.dimension_semantics<parallel>], iteration_bounds = array<i64: 2>, scalar_prefetch = 0 : i64, scratch_operands = 0 : i64, tpu.core_type = #tpu.core_type<tc>, window_params = [{transform_indices = @transform_0, window_bounds = array<i64: 8, 64>}, {transform_indices = @transform_1, window_bounds = array<i64: 8, 64>}, {pipeline_mode = #tpu.pipeline_mode<synchronous>, transform_indices = @transform_2, window_bounds = array<i64: 64, 64>}, {pipeline_mode = #tpu.pipeline_mode<synchronous>, transform_indices = @transform_3, window_bounds = array<i64: 1, 64>}, {pipeline_mode = #tpu.pipeline_mode<synchronous>, transform_indices = @transform_4, window_bounds = array<i64: 1, 64>}, {pipeline_mode = #tpu.pipeline_mode<synchronous>, transform_indices = @transform_5, window_bounds = array<i64: 1, 64>}, {pipeline_mode = #tpu.pipeline_mode<synchronous>, transform_indices = @transform_6, window_bounds = array<i64: 64, 256>}, {pipeline_mode = #tpu.pipeline_mode<synchronous>, transform_indices = @transform_7, window_bounds = array<i64: 1, 256>}, {pipeline_mode = #tpu.pipeline_mode<synchronous>, transform_indices = @transform_8, window_bounds = array<i64: 256, 64>}, {pipeline_mode = #tpu.pipeline_mode<synchronous>, transform_indices = @transform_9, window_bounds = array<i64: 1, 64>}, {pipeline_mode = #tpu.pipeline_mode<synchronous>, transform_indices = @transform_10, window_bounds = array<i64: 1, 64>}, {pipeline_mode = #tpu.pipeline_mode<synchronous>, transform_indices = @transform_11, window_bounds = array<i64: 1, 64>}, {transform_indices = @transform_12, window_bounds = array<i64: 8, 64>}]} {
    %c0 = arith.constant 0 : index
    %c0_0 = arith.constant 0 : index
    %0 = vector.load %arg2[%c0, %c0_0] : memref<8x64xf32, #tpu.memory_space<vmem>>, vector<8x64xf32>
    %c0_1 = arith.constant 0 : index
    %c0_2 = arith.constant 0 : index
    %1 = vector.load %arg1[%c0_1, %c0_2] : memref<8x64xbf16, #tpu.memory_space<vmem>>, vector<8x64xbf16>
    %c0_3 = arith.constant 0 : index
    %c0_4 = arith.constant 0 : index
    %2 = vector.load %arg3[%c0_3, %c0_4] : memref<64x64xbf16, #tpu.memory_space<vmem>>, vector<64x64xbf16>
    %cst = arith.constant dense<0.000000e+00> : vector<8x64xf32>
    %3 = tpu.matmul %1, %2, %cst {dimension_numbers = #tpu.dot_dimension_numbers<[1], [0], [0], [1], [0, 0, 1, 1], [], []>} : vector<8x64xbf16>, vector<64x64xbf16>, vector<8x64xf32> -> vector<8x64xf32>
    %c0_5 = arith.constant 0 : index
    %c0_6 = arith.constant 0 : index
    %4 = vector.load %arg4[%c0_5, %c0_6] : memref<1x64xf32, #tpu.memory_space<vmem>>, vector<1x64xf32>
    %5 = vector.broadcast %4 : vector<1x64xf32> to vector<8x64xf32>
    %6 = arith.addf %3, %5 : vector<8x64xf32>
    %7 = arith.addf %6, %0 : vector<8x64xf32>
    %cst_7 = arith.constant dense<0.000000e+00> : vector<8xf32>
    %8 = vector.multi_reduction <add>, %7, %cst_7 [1] : vector<8x64xf32> to vector<8xf32>
    %9 = vector.shape_cast %8 : vector<8xf32> to vector<8x1xf32>
    %cst_8 = arith.constant 6.400000e+01 : f32
    %10 = vector.broadcast %cst_8 : f32 to vector<8x1xf32>
    %11 = arith.divf %9, %10 : vector<8x1xf32>
    %12 = vector.broadcast %11 : vector<8x1xf32> to vector<8x64xf32>
    %13 = arith.subf %7, %12 : vector<8x64xf32>
    %14 = arith.mulf %13, %13 : vector<8x64xf32>
    %cst_9 = arith.constant dense<0.000000e+00> : vector<8xf32>
    %15 = vector.multi_reduction <add>, %14, %cst_9 [1] : vector<8x64xf32> to vector<8xf32>
    %16 = vector.shape_cast %15 : vector<8xf32> to vector<8x1xf32>
    %cst_10 = arith.constant 6.400000e+01 : f32
    %17 = vector.broadcast %cst_10 : f32 to vector<8x1xf32>
    %18 = arith.divf %16, %17 : vector<8x1xf32>
    %cst_11 = arith.constant 9.99999974E-6 : f32
    %19 = vector.broadcast %cst_11 : f32 to vector<8x1xf32>
    %20 = arith.addf %18, %19 : vector<8x1xf32>
    %21 = math.rsqrt %20 : vector<8x1xf32>
    %22 = vector.broadcast %21 : vector<8x1xf32> to vector<8x64xf32>
    %23 = arith.mulf %13, %22 : vector<8x64xf32>
    %c0_12 = arith.constant 0 : index
    %c0_13 = arith.constant 0 : index
    %24 = vector.load %arg5[%c0_12, %c0_13] : memref<1x64xf32, #tpu.memory_space<vmem>>, vector<1x64xf32>
    %25 = vector.broadcast %24 : vector<1x64xf32> to vector<8x64xf32>
    %26 = arith.mulf %23, %25 : vector<8x64xf32>
    %c0_14 = arith.constant 0 : index
    %c0_15 = arith.constant 0 : index
    %27 = vector.load %arg6[%c0_14, %c0_15] : memref<1x64xf32, #tpu.memory_space<vmem>>, vector<1x64xf32>
    %28 = vector.broadcast %27 : vector<1x64xf32> to vector<8x64xf32>
    %29 = arith.addf %26, %28 : vector<8x64xf32>
    %30 = arith.truncf %29 : vector<8x64xf32> to vector<8x64xbf16>
    %c0_16 = arith.constant 0 : index
    %c0_17 = arith.constant 0 : index
    %31 = vector.load %arg7[%c0_16, %c0_17] : memref<64x256xbf16, #tpu.memory_space<vmem>>, vector<64x256xbf16>
    %cst_18 = arith.constant dense<0.000000e+00> : vector<8x256xf32>
    %32 = tpu.matmul %30, %31, %cst_18 {dimension_numbers = #tpu.dot_dimension_numbers<[1], [0], [0], [1], [0, 0, 1, 1], [], []>} : vector<8x64xbf16>, vector<64x256xbf16>, vector<8x256xf32> -> vector<8x256xf32>
    %c0_19 = arith.constant 0 : index
    %c0_20 = arith.constant 0 : index
    %33 = vector.load %arg8[%c0_19, %c0_20] : memref<1x256xf32, #tpu.memory_space<vmem>>, vector<1x256xf32>
    %34 = vector.broadcast %33 : vector<1x256xf32> to vector<8x256xf32>
    %35 = arith.addf %32, %34 : vector<8x256xf32>
    %cst_21 = arith.constant 0.000000e+00 : f32
    %36 = vector.broadcast %cst_21 : f32 to vector<8x256xf32>
    %37 = arith.maximumf %35, %36 : vector<8x256xf32>
    %38 = arith.truncf %37 : vector<8x256xf32> to vector<8x256xbf16>
    %c0_22 = arith.constant 0 : index
    %c0_23 = arith.constant 0 : index
    %39 = vector.load %arg9[%c0_22, %c0_23] : memref<256x64xbf16, #tpu.memory_space<vmem>>, vector<256x64xbf16>
    %cst_24 = arith.constant dense<0.000000e+00> : vector<8x64xf32>
    %40 = tpu.matmul %38, %39, %cst_24 {dimension_numbers = #tpu.dot_dimension_numbers<[1], [0], [0], [1], [0, 0, 1, 1], [], []>} : vector<8x256xbf16>, vector<256x64xbf16>, vector<8x64xf32> -> vector<8x64xf32>
    %c0_25 = arith.constant 0 : index
    %c0_26 = arith.constant 0 : index
    %41 = vector.load %arg10[%c0_25, %c0_26] : memref<1x64xf32, #tpu.memory_space<vmem>>, vector<1x64xf32>
    %42 = vector.broadcast %41 : vector<1x64xf32> to vector<8x64xf32>
    %43 = arith.addf %40, %42 : vector<8x64xf32>
    %44 = arith.addf %43, %29 : vector<8x64xf32>
    %cst_27 = arith.constant dense<0.000000e+00> : vector<8xf32>
    %45 = vector.multi_reduction <add>, %44, %cst_27 [1] : vector<8x64xf32> to vector<8xf32>
    %46 = vector.shape_cast %45 : vector<8xf32> to vector<8x1xf32>
    %cst_28 = arith.constant 6.400000e+01 : f32
    %47 = vector.broadcast %cst_28 : f32 to vector<8x1xf32>
    %48 = arith.divf %46, %47 : vector<8x1xf32>
    %49 = vector.broadcast %48 : vector<8x1xf32> to vector<8x64xf32>
    %50 = arith.subf %44, %49 : vector<8x64xf32>
    %51 = arith.mulf %50, %50 : vector<8x64xf32>
    %cst_29 = arith.constant dense<0.000000e+00> : vector<8xf32>
    %52 = vector.multi_reduction <add>, %51, %cst_29 [1] : vector<8x64xf32> to vector<8xf32>
    %53 = vector.shape_cast %52 : vector<8xf32> to vector<8x1xf32>
    %cst_30 = arith.constant 6.400000e+01 : f32
    %54 = vector.broadcast %cst_30 : f32 to vector<8x1xf32>
    %55 = arith.divf %53, %54 : vector<8x1xf32>
    %cst_31 = arith.constant 9.99999974E-6 : f32
    %56 = vector.broadcast %cst_31 : f32 to vector<8x1xf32>
    %57 = arith.addf %55, %56 : vector<8x1xf32>
    %58 = math.rsqrt %57 : vector<8x1xf32>
    %59 = vector.broadcast %58 : vector<8x1xf32> to vector<8x64xf32>
    %60 = arith.mulf %50, %59 : vector<8x64xf32>
    %c0_32 = arith.constant 0 : index
    %c0_33 = arith.constant 0 : index
    %61 = vector.load %arg11[%c0_32, %c0_33] : memref<1x64xf32, #tpu.memory_space<vmem>>, vector<1x64xf32>
    %62 = vector.broadcast %61 : vector<1x64xf32> to vector<8x64xf32>
    %63 = arith.mulf %60, %62 : vector<8x64xf32>
    %c0_34 = arith.constant 0 : index
    %c0_35 = arith.constant 0 : index
    %64 = vector.load %arg12[%c0_34, %c0_35] : memref<1x64xf32, #tpu.memory_space<vmem>>, vector<1x64xf32>
    %65 = vector.broadcast %64 : vector<1x64xf32> to vector<8x64xf32>
    %66 = arith.addf %63, %65 : vector<8x64xf32>
    %c0_36 = arith.constant 0 : index
    %c0_37 = arith.constant 0 : index
    %67 = vector.load %arg13[%c0_36, %c0_37] : memref<8x64xf32, #tpu.memory_space<vmem>>, vector<8x64xf32>
    tpu.vector_store %arg13[%c0_36, %c0_37], %66 {strides = array<i32>} : memref<8x64xf32, #tpu.memory_space<vmem>>, vector<8x64xf32>,
    return
  }
  func.func @transform_0(%arg0: i32) -> (i32, i32) {
    %c0_i32 = arith.constant 0 : i32
    %c0_i32_0 = arith.constant 0 : i32
    return %arg0, %c0_i32 : i32, i32
  }
  func.func @transform_1(%arg0: i32) -> (i32, i32) {
    %c0_i32 = arith.constant 0 : i32
    %c0_i32_0 = arith.constant 0 : i32
    return %arg0, %c0_i32 : i32, i32
  }
  func.func @transform_2(%arg0: i32) -> (i32, i32) {
    %c0_i32 = arith.constant 0 : i32
    %c0_i32_0 = arith.constant 0 : i32
    %c0_i32_1 = arith.constant 0 : i32
    return %c0_i32, %c0_i32_0 : i32, i32
  }
  func.func @transform_3(%arg0: i32) -> (i32, i32) {
    %c0_i32 = arith.constant 0 : i32
    %c0_i32_0 = arith.constant 0 : i32
    %c0_i32_1 = arith.constant 0 : i32
    return %c0_i32, %c0_i32_0 : i32, i32
  }
  func.func @transform_4(%arg0: i32) -> (i32, i32) {
    %c0_i32 = arith.constant 0 : i32
    %c0_i32_0 = arith.constant 0 : i32
    %c0_i32_1 = arith.constant 0 : i32
    return %c0_i32, %c0_i32_0 : i32, i32
  }
  func.func @transform_5(%arg0: i32) -> (i32, i32) {
    %c0_i32 = arith.constant 0 : i32
    %c0_i32_0 = arith.constant 0 : i32
    %c0_i32_1 = arith.constant 0 : i32
    return %c0_i32, %c0_i32_0 : i32, i32
  }
  func.func @transform_6(%arg0: i32) -> (i32, i32) {
    %c0_i32 = arith.constant 0 : i32
    %c0_i32_0 = arith.constant 0 : i32
    %c0_i32_1 = arith.constant 0 : i32
    return %c0_i32, %c0_i32_0 : i32, i32
  }
  func.func @transform_7(%arg0: i32) -> (i32, i32) {
    %c0_i32 = arith.constant 0 : i32
    %c0_i32_0 = arith.constant 0 : i32
    %c0_i32_1 = arith.constant 0 : i32
    return %c0_i32, %c0_i32_0 : i32, i32
  }
  func.func @transform_8(%arg0: i32) -> (i32, i32) {
    %c0_i32 = arith.constant 0 : i32
    %c0_i32_0 = arith.constant 0 : i32
    %c0_i32_1 = arith.constant 0 : i32
    return %c0_i32, %c0_i32_0 : i32, i32
  }
  func.func @transform_9(%arg0: i32) -> (i32, i32) {
    %c0_i32 = arith.constant 0 : i32
    %c0_i32_0 = arith.constant 0 : i32
    %c0_i32_1 = arith.constant 0 : i32
    return %c0_i32, %c0_i32_0 : i32, i32
  }
  func.func @transform_10(%arg0: i32) -> (i32, i32) {
    %c0_i32 = arith.constant 0 : i32
    %c0_i32_0 = arith.constant 0 : i32
    %c0_i32_1 = arith.constant 0 : i32
    return %c0_i32, %c0_i32_0 : i32, i32
  }
  func.func @transform_11(%arg0: i32) -> (i32, i32) {
    %c0_i32 = arith.constant 0 : i32
    %c0_i32_0 = arith.constant 0 : i32
    %c0_i32_1 = arith.constant 0 : i32
    return %c0_i32, %c0_i32_0 : i32, i32
  }
  func.func @transform_12(%arg0: i32) -> (i32, i32) {
    %c0_i32 = arith.constant 0 : i32
    %c0_i32_0 = arith.constant 0 : i32
    return %arg0, %c0_i32 : i32, i32
  }
}

module attributes {stable_mosaic.version = 11 : i64} {
  func.func @_attn_heads_kernel(%arg0: i32, %arg1: memref<1x8x64xf32, #tpu.memory_space<vmem>>, %arg2: memref<64x192xbf16, #tpu.memory_space<vmem>>, %arg3: memref<1x8x8x8xbf16, #tpu.memory_space<vmem>>) attributes {dimension_semantics = [#tpu.dimension_semantics<parallel>], iteration_bounds = array<i64: 2>, scalar_prefetch = 0 : i64, scratch_operands = 0 : i64, tpu.core_type = #tpu.core_type<tc>, window_params = [{transform_indices = @transform_0, window_bounds = array<i64: 1, 8, 64>}, {pipeline_mode = #tpu.pipeline_mode<synchronous>, transform_indices = @transform_1, window_bounds = array<i64: 64, 192>}, {transform_indices = @transform_2, window_bounds = array<i64: 1, 8, 8, 8>}]} {
    %c0 = arith.constant 0 : index
    %c0_0 = arith.constant 0 : index
    %c0_1 = arith.constant 0 : index
    %0 = vector.load %arg1[%c0, %c0_0, %c0_1] : memref<1x8x64xf32, #tpu.memory_space<vmem>>, vector<1x8x64xf32>
    %1 = vector.shape_cast %0 : vector<1x8x64xf32> to vector<8x64xf32>
    %2 = arith.truncf %1 : vector<8x64xf32> to vector<8x64xbf16>
    %c0_2 = arith.constant 0 : index
    %c0_3 = arith.constant 0 : index
    %3 = vector.load %arg2[%c0_2, %c0_3] : memref<64x192xbf16, #tpu.memory_space<vmem>>, vector<64x192xbf16>
    %cst = arith.constant dense<0.000000e+00> : vector<8x192xf32>
    %4 = tpu.matmul %2, %3, %cst {dimension_numbers = #tpu.dot_dimension_numbers<[1], [0], [0], [1], [0, 0, 1, 1], [], []>} : vector<8x64xbf16>, vector<64x192xbf16>, vector<8x192xf32> -> vector<8x192xf32>
    %5 = vector.extract_strided_slice %4 {offsets = [0, 0], sizes = [8, 64], strides = [1, 1]} : vector<8x192xf32> to vector<8x64xf32>
    %cst_4 = arith.constant 0.353553385 : f32
    %6 = vector.broadcast %cst_4 : f32 to vector<8x64xf32>
    %7 = arith.mulf %5, %6 : vector<8x64xf32>
    %8 = arith.truncf %7 : vector<8x64xf32> to vector<8x64xbf16>
    %9 = vector.extract_strided_slice %4 {offsets = [0, 64], sizes = [8, 64], strides = [1, 1]} : vector<8x192xf32> to vector<8x64xf32>
    %10 = arith.truncf %9 : vector<8x64xf32> to vector<8x64xbf16>
    %11 = vector.extract_strided_slice %4 {offsets = [0, 128], sizes = [8, 64], strides = [1, 1]} : vector<8x192xf32> to vector<8x64xf32>
    %12 = arith.truncf %11 : vector<8x64xf32> to vector<8x64xbf16>
    %13 = tpu.transpose %10, [1, 0] : vector<8x64xbf16> -> vector<64x8xbf16>
    %14 = vector.extract_strided_slice %8 {offsets = [0, 0], sizes = [8, 8], strides = [1, 1]} : vector<8x64xbf16> to vector<8x8xbf16>
    %15 = vector.extract_strided_slice %13 {offsets = [0, 0], sizes = [8, 8], strides = [1, 1]} : vector<64x8xbf16> to vector<8x8xbf16>
    %cst_5 = arith.constant dense<0.000000e+00> : vector<8x8xf32>
    %16 = tpu.matmul %14, %15, %cst_5 {dimension_numbers = #tpu.dot_dimension_numbers<[1], [0], [0], [1], [0, 0, 1, 1], [], []>} : vector<8x8xbf16>, vector<8x8xbf16>, vector<8x8xf32> -> vector<8x8xf32>
    %cst_6 = arith.constant dense<0xFF800000> : vector<8xf32>
    %17 = vector.multi_reduction <maximumf>, %16, %cst_6 [1] : vector<8x8xf32> to vector<8xf32>
    %18 = vector.shape_cast %17 : vector<8xf32> to vector<8x1xf32>
    %19 = vector.broadcast %18 : vector<8x1xf32> to vector<8x8xf32>
    %20 = arith.subf %16, %19 : vector<8x8xf32>
    %21 = math.exp %20 : vector<8x8xf32>
    %cst_7 = arith.constant dense<0.000000e+00> : vector<8xf32>
    %22 = vector.multi_reduction <add>, %21, %cst_7 [1] : vector<8x8xf32> to vector<8xf32>
    %23 = vector.shape_cast %22 : vector<8xf32> to vector<8x1xf32>
    %24 = tpu.reciprocal %23 {approx = true} : vector<8x1xf32> -> vector<8x1xf32>
    %25 = vector.broadcast %24 : vector<8x1xf32> to vector<8x8xf32>
    %26 = arith.mulf %21, %25 : vector<8x8xf32>
    %27 = arith.truncf %26 : vector<8x8xf32> to vector<8x8xbf16>
    %28 = vector.extract_strided_slice %12 {offsets = [0, 0], sizes = [8, 8], strides = [1, 1]} : vector<8x64xbf16> to vector<8x8xbf16>
    %cst_8 = arith.constant dense<0.000000e+00> : vector<8x8xf32>
    %29 = tpu.matmul %27, %28, %cst_8 {dimension_numbers = #tpu.dot_dimension_numbers<[1], [0], [0], [1], [0, 0, 1, 1], [], []>} : vector<8x8xbf16>, vector<8x8xbf16>, vector<8x8xf32> -> vector<8x8xf32>
    %30 = arith.truncf %29 : vector<8x8xf32> to vector<8x8xbf16>
    %c0_9 = arith.constant 0 : index
    %c0_10 = arith.constant 0 : index
    %c0_11 = arith.constant 0 : index
    %c0_12 = arith.constant 0 : index
    %31 = vector.load %arg3[%c0_9, %c0_10, %c0_11, %c0_12] : memref<1x8x8x8xbf16, #tpu.memory_space<vmem>>, vector<1x1x8x8xbf16>
    %32 = vector.shape_cast %31 : vector<1x1x8x8xbf16> to vector<8x8xbf16>
    %33 = vector.shape_cast %30 : vector<8x8xbf16> to vector<1x1x8x8xbf16>
    tpu.vector_store %arg3[%c0_9, %c0_10, %c0_11, %c0_12], %33 {strides = array<i32>} : memref<1x8x8x8xbf16, #tpu.memory_space<vmem>>, vector<1x1x8x8xbf16>,
    %34 = vector.extract_strided_slice %8 {offsets = [0, 8], sizes = [8, 8], strides = [1, 1]} : vector<8x64xbf16> to vector<8x8xbf16>
    %35 = vector.extract_strided_slice %13 {offsets = [8, 0], sizes = [8, 8], strides = [1, 1]} : vector<64x8xbf16> to vector<8x8xbf16>
    %cst_13 = arith.constant dense<0.000000e+00> : vector<8x8xf32>
    %36 = tpu.matmul %34, %35, %cst_13 {dimension_numbers = #tpu.dot_dimension_numbers<[1], [0], [0], [1], [0, 0, 1, 1], [], []>} : vector<8x8xbf16>, vector<8x8xbf16>, vector<8x8xf32> -> vector<8x8xf32>
    %cst_14 = arith.constant dense<0xFF800000> : vector<8xf32>
    %37 = vector.multi_reduction <maximumf>, %36, %cst_14 [1] : vector<8x8xf32> to vector<8xf32>
    %38 = vector.shape_cast %37 : vector<8xf32> to vector<8x1xf32>
    %39 = vector.broadcast %38 : vector<8x1xf32> to vector<8x8xf32>
    %40 = arith.subf %36, %39 : vector<8x8xf32>
    %41 = math.exp %40 : vector<8x8xf32>
    %cst_15 = arith.constant dense<0.000000e+00> : vector<8xf32>
    %42 = vector.multi_reduction <add>, %41, %cst_15 [1] : vector<8x8xf32> to vector<8xf32>
    %43 = vector.shape_cast %42 : vector<8xf32> to vector<8x1xf32>
    %44 = tpu.reciprocal %43 {approx = true} : vector<8x1xf32> -> vector<8x1xf32>
    %45 = vector.broadcast %44 : vector<8x1xf32> to vector<8x8xf32>
    %46 = arith.mulf %41, %45 : vector<8x8xf32>
    %47 = arith.truncf %46 : vector<8x8xf32> to vector<8x8xbf16>
    %48 = vector.extract_strided_slice %12 {offsets = [0, 8], sizes = [8, 8], strides = [1, 1]} : vector<8x64xbf16> to vector<8x8xbf16>
    %cst_16 = arith.constant dense<0.000000e+00> : vector<8x8xf32>
    %49 = tpu.matmul %47, %48, %cst_16 {dimension_numbers = #tpu.dot_dimension_numbers<[1], [0], [0], [1], [0, 0, 1, 1], [], []>} : vector<8x8xbf16>, vector<8x8xbf16>, vector<8x8xf32> -> vector<8x8xf32>
    %50 = arith.truncf %49 : vector<8x8xf32> to vector<8x8xbf16>
    %c0_17 = arith.constant 0 : index
    %c1 = arith.constant 1 : index
    %c0_18 = arith.constant 0 : index
    %c0_19 = arith.constant 0 : index
    %51 = vector.load %arg3[%c0_17, %c1, %c0_18, %c0_19] : memref<1x8x8x8xbf16, #tpu.memory_space<vmem>>, vector<1x1x8x8xbf16>
    %52 = vector.shape_cast %51 : vector<1x1x8x8xbf16> to vector<8x8xbf16>
    %53 = vector.shape_cast %50 : vector<8x8xbf16> to vector<1x1x8x8xbf16>
    tpu.vector_store %arg3[%c0_17, %c1, %c0_18, %c0_19], %53 {strides = array<i32>} : memref<1x8x8x8xbf16, #tpu.memory_space<vmem>>, vector<1x1x8x8xbf16>,
    %54 = vector.extract_strided_slice %8 {offsets = [0, 16], sizes = [8, 8], strides = [1, 1]} : vector<8x64xbf16> to vector<8x8xbf16>
    %55 = vector.extract_strided_slice %13 {offsets = [16, 0], sizes = [8, 8], strides = [1, 1]} : vector<64x8xbf16> to vector<8x8xbf16>
    %cst_20 = arith.constant dense<0.000000e+00> : vector<8x8xf32>
    %56 = tpu.matmul %54, %55, %cst_20 {dimension_numbers = #tpu.dot_dimension_numbers<[1], [0], [0], [1], [0, 0, 1, 1], [], []>} : vector<8x8xbf16>, vector<8x8xbf16>, vector<8x8xf32> -> vector<8x8xf32>
    %cst_21 = arith.constant dense<0xFF800000> : vector<8xf32>
    %57 = vector.multi_reduction <maximumf>, %56, %cst_21 [1] : vector<8x8xf32> to vector<8xf32>
    %58 = vector.shape_cast %57 : vector<8xf32> to vector<8x1xf32>
    %59 = vector.broadcast %58 : vector<8x1xf32> to vector<8x8xf32>
    %60 = arith.subf %56, %59 : vector<8x8xf32>
    %61 = math.exp %60 : vector<8x8xf32>
    %cst_22 = arith.constant dense<0.000000e+00> : vector<8xf32>
    %62 = vector.multi_reduction <add>, %61, %cst_22 [1] : vector<8x8xf32> to vector<8xf32>
    %63 = vector.shape_cast %62 : vector<8xf32> to vector<8x1xf32>
    %64 = tpu.reciprocal %63 {approx = true} : vector<8x1xf32> -> vector<8x1xf32>
    %65 = vector.broadcast %64 : vector<8x1xf32> to vector<8x8xf32>
    %66 = arith.mulf %61, %65 : vector<8x8xf32>
    %67 = arith.truncf %66 : vector<8x8xf32> to vector<8x8xbf16>
    %68 = vector.extract_strided_slice %12 {offsets = [0, 16], sizes = [8, 8], strides = [1, 1]} : vector<8x64xbf16> to vector<8x8xbf16>
    %cst_23 = arith.constant dense<0.000000e+00> : vector<8x8xf32>
    %69 = tpu.matmul %67, %68, %cst_23 {dimension_numbers = #tpu.dot_dimension_numbers<[1], [0], [0], [1], [0, 0, 1, 1], [], []>} : vector<8x8xbf16>, vector<8x8xbf16>, vector<8x8xf32> -> vector<8x8xf32>
    %70 = arith.truncf %69 : vector<8x8xf32> to vector<8x8xbf16>
    %c0_24 = arith.constant 0 : index
    %c2 = arith.constant 2 : index
    %c0_25 = arith.constant 0 : index
    %c0_26 = arith.constant 0 : index
    %71 = vector.load %arg3[%c0_24, %c2, %c0_25, %c0_26] : memref<1x8x8x8xbf16, #tpu.memory_space<vmem>>, vector<1x1x8x8xbf16>
    %72 = vector.shape_cast %71 : vector<1x1x8x8xbf16> to vector<8x8xbf16>
    %73 = vector.shape_cast %70 : vector<8x8xbf16> to vector<1x1x8x8xbf16>
    tpu.vector_store %arg3[%c0_24, %c2, %c0_25, %c0_26], %73 {strides = array<i32>} : memref<1x8x8x8xbf16, #tpu.memory_space<vmem>>, vector<1x1x8x8xbf16>,
    %74 = vector.extract_strided_slice %8 {offsets = [0, 24], sizes = [8, 8], strides = [1, 1]} : vector<8x64xbf16> to vector<8x8xbf16>
    %75 = vector.extract_strided_slice %13 {offsets = [24, 0], sizes = [8, 8], strides = [1, 1]} : vector<64x8xbf16> to vector<8x8xbf16>
    %cst_27 = arith.constant dense<0.000000e+00> : vector<8x8xf32>
    %76 = tpu.matmul %74, %75, %cst_27 {dimension_numbers = #tpu.dot_dimension_numbers<[1], [0], [0], [1], [0, 0, 1, 1], [], []>} : vector<8x8xbf16>, vector<8x8xbf16>, vector<8x8xf32> -> vector<8x8xf32>
    %cst_28 = arith.constant dense<0xFF800000> : vector<8xf32>
    %77 = vector.multi_reduction <maximumf>, %76, %cst_28 [1] : vector<8x8xf32> to vector<8xf32>
    %78 = vector.shape_cast %77 : vector<8xf32> to vector<8x1xf32>
    %79 = vector.broadcast %78 : vector<8x1xf32> to vector<8x8xf32>
    %80 = arith.subf %76, %79 : vector<8x8xf32>
    %81 = math.exp %80 : vector<8x8xf32>
    %cst_29 = arith.constant dense<0.000000e+00> : vector<8xf32>
    %82 = vector.multi_reduction <add>, %81, %cst_29 [1] : vector<8x8xf32> to vector<8xf32>
    %83 = vector.shape_cast %82 : vector<8xf32> to vector<8x1xf32>
    %84 = tpu.reciprocal %83 {approx = true} : vector<8x1xf32> -> vector<8x1xf32>
    %85 = vector.broadcast %84 : vector<8x1xf32> to vector<8x8xf32>
    %86 = arith.mulf %81, %85 : vector<8x8xf32>
    %87 = arith.truncf %86 : vector<8x8xf32> to vector<8x8xbf16>
    %88 = vector.extract_strided_slice %12 {offsets = [0, 24], sizes = [8, 8], strides = [1, 1]} : vector<8x64xbf16> to vector<8x8xbf16>
    %cst_30 = arith.constant dense<0.000000e+00> : vector<8x8xf32>
    %89 = tpu.matmul %87, %88, %cst_30 {dimension_numbers = #tpu.dot_dimension_numbers<[1], [0], [0], [1], [0, 0, 1, 1], [], []>} : vector<8x8xbf16>, vector<8x8xbf16>, vector<8x8xf32> -> vector<8x8xf32>
    %90 = arith.truncf %89 : vector<8x8xf32> to vector<8x8xbf16>
    %c0_31 = arith.constant 0 : index
    %c3 = arith.constant 3 : index
    %c0_32 = arith.constant 0 : index
    %c0_33 = arith.constant 0 : index
    %91 = vector.load %arg3[%c0_31, %c3, %c0_32, %c0_33] : memref<1x8x8x8xbf16, #tpu.memory_space<vmem>>, vector<1x1x8x8xbf16>
    %92 = vector.shape_cast %91 : vector<1x1x8x8xbf16> to vector<8x8xbf16>
    %93 = vector.shape_cast %90 : vector<8x8xbf16> to vector<1x1x8x8xbf16>
    tpu.vector_store %arg3[%c0_31, %c3, %c0_32, %c0_33], %93 {strides = array<i32>} : memref<1x8x8x8xbf16, #tpu.memory_space<vmem>>, vector<1x1x8x8xbf16>,
    %94 = vector.extract_strided_slice %8 {offsets = [0, 32], sizes = [8, 8], strides = [1, 1]} : vector<8x64xbf16> to vector<8x8xbf16>
    %95 = vector.extract_strided_slice %13 {offsets = [32, 0], sizes = [8, 8], strides = [1, 1]} : vector<64x8xbf16> to vector<8x8xbf16>
    %cst_34 = arith.constant dense<0.000000e+00> : vector<8x8xf32>
    %96 = tpu.matmul %94, %95, %cst_34 {dimension_numbers = #tpu.dot_dimension_numbers<[1], [0], [0], [1], [0, 0, 1, 1], [], []>} : vector<8x8xbf16>, vector<8x8xbf16>, vector<8x8xf32> -> vector<8x8xf32>
    %cst_35 = arith.constant dense<0xFF800000> : vector<8xf32>
    %97 = vector.multi_reduction <maximumf>, %96, %cst_35 [1] : vector<8x8xf32> to vector<8xf32>
    %98 = vector.shape_cast %97 : vector<8xf32> to vector<8x1xf32>
    %99 = vector.broadcast %98 : vector<8x1xf32> to vector<8x8xf32>
    %100 = arith.subf %96, %99 : vector<8x8xf32>
    %101 = math.exp %100 : vector<8x8xf32>
    %cst_36 = arith.constant dense<0.000000e+00> : vector<8xf32>
    %102 = vector.multi_reduction <add>, %101, %cst_36 [1] : vector<8x8xf32> to vector<8xf32>
    %103 = vector.shape_cast %102 : vector<8xf32> to vector<8x1xf32>
    %104 = tpu.reciprocal %103 {approx = true} : vector<8x1xf32> -> vector<8x1xf32>
    %105 = vector.broadcast %104 : vector<8x1xf32> to vector<8x8xf32>
    %106 = arith.mulf %101, %105 : vector<8x8xf32>
    %107 = arith.truncf %106 : vector<8x8xf32> to vector<8x8xbf16>
    %108 = vector.extract_strided_slice %12 {offsets = [0, 32], sizes = [8, 8], strides = [1, 1]} : vector<8x64xbf16> to vector<8x8xbf16>
    %cst_37 = arith.constant dense<0.000000e+00> : vector<8x8xf32>
    %109 = tpu.matmul %107, %108, %cst_37 {dimension_numbers = #tpu.dot_dimension_numbers<[1], [0], [0], [1], [0, 0, 1, 1], [], []>} : vector<8x8xbf16>, vector<8x8xbf16>, vector<8x8xf32> -> vector<8x8xf32>
    %110 = arith.truncf %109 : vector<8x8xf32> to vector<8x8xbf16>
    %c0_38 = arith.constant 0 : index
    %c4 = arith.constant 4 : index
    %c0_39 = arith.constant 0 : index
    %c0_40 = arith.constant 0 : index
    %111 = vector.load %arg3[%c0_38, %c4, %c0_39, %c0_40] : memref<1x8x8x8xbf16, #tpu.memory_space<vmem>>, vector<1x1x8x8xbf16>
    %112 = vector.shape_cast %111 : vector<1x1x8x8xbf16> to vector<8x8xbf16>
    %113 = vector.shape_cast %110 : vector<8x8xbf16> to vector<1x1x8x8xbf16>
    tpu.vector_store %arg3[%c0_38, %c4, %c0_39, %c0_40], %113 {strides = array<i32>} : memref<1x8x8x8xbf16, #tpu.memory_space<vmem>>, vector<1x1x8x8xbf16>,
    %114 = vector.extract_strided_slice %8 {offsets = [0, 40], sizes = [8, 8], strides = [1, 1]} : vector<8x64xbf16> to vector<8x8xbf16>
    %115 = vector.extract_strided_slice %13 {offsets = [40, 0], sizes = [8, 8], strides = [1, 1]} : vector<64x8xbf16> to vector<8x8xbf16>
    %cst_41 = arith.constant dense<0.000000e+00> : vector<8x8xf32>
    %116 = tpu.matmul %114, %115, %cst_41 {dimension_numbers = #tpu.dot_dimension_numbers<[1], [0], [0], [1], [0, 0, 1, 1], [], []>} : vector<8x8xbf16>, vector<8x8xbf16>, vector<8x8xf32> -> vector<8x8xf32>
    %cst_42 = arith.constant dense<0xFF800000> : vector<8xf32>
    %117 = vector.multi_reduction <maximumf>, %116, %cst_42 [1] : vector<8x8xf32> to vector<8xf32>
    %118 = vector.shape_cast %117 : vector<8xf32> to vector<8x1xf32>
    %119 = vector.broadcast %118 : vector<8x1xf32> to vector<8x8xf32>
    %120 = arith.subf %116, %119 : vector<8x8xf32>
    %121 = math.exp %120 : vector<8x8xf32>
    %cst_43 = arith.constant dense<0.000000e+00> : vector<8xf32>
    %122 = vector.multi_reduction <add>, %121, %cst_43 [1] : vector<8x8xf32> to vector<8xf32>
    %123 = vector.shape_cast %122 : vector<8xf32> to vector<8x1xf32>
    %124 = tpu.reciprocal %123 {approx = true} : vector<8x1xf32> -> vector<8x1xf32>
    %125 = vector.broadcast %124 : vector<8x1xf32> to vector<8x8xf32>
    %126 = arith.mulf %121, %125 : vector<8x8xf32>
    %127 = arith.truncf %126 : vector<8x8xf32> to vector<8x8xbf16>
    %128 = vector.extract_strided_slice %12 {offsets = [0, 40], sizes = [8, 8], strides = [1, 1]} : vector<8x64xbf16> to vector<8x8xbf16>
    %cst_44 = arith.constant dense<0.000000e+00> : vector<8x8xf32>
    %129 = tpu.matmul %127, %128, %cst_44 {dimension_numbers = #tpu.dot_dimension_numbers<[1], [0], [0], [1], [0, 0, 1, 1], [], []>} : vector<8x8xbf16>, vector<8x8xbf16>, vector<8x8xf32> -> vector<8x8xf32>
    %130 = arith.truncf %129 : vector<8x8xf32> to vector<8x8xbf16>
    %c0_45 = arith.constant 0 : index
    %c5 = arith.constant 5 : index
    %c0_46 = arith.constant 0 : index
    %c0_47 = arith.constant 0 : index
    %131 = vector.load %arg3[%c0_45, %c5, %c0_46, %c0_47] : memref<1x8x8x8xbf16, #tpu.memory_space<vmem>>, vector<1x1x8x8xbf16>
    %132 = vector.shape_cast %131 : vector<1x1x8x8xbf16> to vector<8x8xbf16>
    %133 = vector.shape_cast %130 : vector<8x8xbf16> to vector<1x1x8x8xbf16>
    tpu.vector_store %arg3[%c0_45, %c5, %c0_46, %c0_47], %133 {strides = array<i32>} : memref<1x8x8x8xbf16, #tpu.memory_space<vmem>>, vector<1x1x8x8xbf16>,
    %134 = vector.extract_strided_slice %8 {offsets = [0, 48], sizes = [8, 8], strides = [1, 1]} : vector<8x64xbf16> to vector<8x8xbf16>
    %135 = vector.extract_strided_slice %13 {offsets = [48, 0], sizes = [8, 8], strides = [1, 1]} : vector<64x8xbf16> to vector<8x8xbf16>
    %cst_48 = arith.constant dense<0.000000e+00> : vector<8x8xf32>
    %136 = tpu.matmul %134, %135, %cst_48 {dimension_numbers = #tpu.dot_dimension_numbers<[1], [0], [0], [1], [0, 0, 1, 1], [], []>} : vector<8x8xbf16>, vector<8x8xbf16>, vector<8x8xf32> -> vector<8x8xf32>
    %cst_49 = arith.constant dense<0xFF800000> : vector<8xf32>
    %137 = vector.multi_reduction <maximumf>, %136, %cst_49 [1] : vector<8x8xf32> to vector<8xf32>
    %138 = vector.shape_cast %137 : vector<8xf32> to vector<8x1xf32>
    %139 = vector.broadcast %138 : vector<8x1xf32> to vector<8x8xf32>
    %140 = arith.subf %136, %139 : vector<8x8xf32>
    %141 = math.exp %140 : vector<8x8xf32>
    %cst_50 = arith.constant dense<0.000000e+00> : vector<8xf32>
    %142 = vector.multi_reduction <add>, %141, %cst_50 [1] : vector<8x8xf32> to vector<8xf32>
    %143 = vector.shape_cast %142 : vector<8xf32> to vector<8x1xf32>
    %144 = tpu.reciprocal %143 {approx = true} : vector<8x1xf32> -> vector<8x1xf32>
    %145 = vector.broadcast %144 : vector<8x1xf32> to vector<8x8xf32>
    %146 = arith.mulf %141, %145 : vector<8x8xf32>
    %147 = arith.truncf %146 : vector<8x8xf32> to vector<8x8xbf16>
    %148 = vector.extract_strided_slice %12 {offsets = [0, 48], sizes = [8, 8], strides = [1, 1]} : vector<8x64xbf16> to vector<8x8xbf16>
    %cst_51 = arith.constant dense<0.000000e+00> : vector<8x8xf32>
    %149 = tpu.matmul %147, %148, %cst_51 {dimension_numbers = #tpu.dot_dimension_numbers<[1], [0], [0], [1], [0, 0, 1, 1], [], []>} : vector<8x8xbf16>, vector<8x8xbf16>, vector<8x8xf32> -> vector<8x8xf32>
    %150 = arith.truncf %149 : vector<8x8xf32> to vector<8x8xbf16>
    %c0_52 = arith.constant 0 : index
    %c6 = arith.constant 6 : index
    %c0_53 = arith.constant 0 : index
    %c0_54 = arith.constant 0 : index
    %151 = vector.load %arg3[%c0_52, %c6, %c0_53, %c0_54] : memref<1x8x8x8xbf16, #tpu.memory_space<vmem>>, vector<1x1x8x8xbf16>
    %152 = vector.shape_cast %151 : vector<1x1x8x8xbf16> to vector<8x8xbf16>
    %153 = vector.shape_cast %150 : vector<8x8xbf16> to vector<1x1x8x8xbf16>
    tpu.vector_store %arg3[%c0_52, %c6, %c0_53, %c0_54], %153 {strides = array<i32>} : memref<1x8x8x8xbf16, #tpu.memory_space<vmem>>, vector<1x1x8x8xbf16>,
    %154 = vector.extract_strided_slice %8 {offsets = [0, 56], sizes = [8, 8], strides = [1, 1]} : vector<8x64xbf16> to vector<8x8xbf16>
    %155 = vector.extract_strided_slice %13 {offsets = [56, 0], sizes = [8, 8], strides = [1, 1]} : vector<64x8xbf16> to vector<8x8xbf16>
    %cst_55 = arith.constant dense<0.000000e+00> : vector<8x8xf32>
    %156 = tpu.matmul %154, %155, %cst_55 {dimension_numbers = #tpu.dot_dimension_numbers<[1], [0], [0], [1], [0, 0, 1, 1], [], []>} : vector<8x8xbf16>, vector<8x8xbf16>, vector<8x8xf32> -> vector<8x8xf32>
    %cst_56 = arith.constant dense<0xFF800000> : vector<8xf32>
    %157 = vector.multi_reduction <maximumf>, %156, %cst_56 [1] : vector<8x8xf32> to vector<8xf32>
    %158 = vector.shape_cast %157 : vector<8xf32> to vector<8x1xf32>
    %159 = vector.broadcast %158 : vector<8x1xf32> to vector<8x8xf32>
    %160 = arith.subf %156, %159 : vector<8x8xf32>
    %161 = math.exp %160 : vector<8x8xf32>
    %cst_57 = arith.constant dense<0.000000e+00> : vector<8xf32>
    %162 = vector.multi_reduction <add>, %161, %cst_57 [1] : vector<8x8xf32> to vector<8xf32>
    %163 = vector.shape_cast %162 : vector<8xf32> to vector<8x1xf32>
    %164 = tpu.reciprocal %163 {approx = true} : vector<8x1xf32> -> vector<8x1xf32>
    %165 = vector.broadcast %164 : vector<8x1xf32> to vector<8x8xf32>
    %166 = arith.mulf %161, %165 : vector<8x8xf32>
    %167 = arith.truncf %166 : vector<8x8xf32> to vector<8x8xbf16>
    %168 = vector.extract_strided_slice %12 {offsets = [0, 56], sizes = [8, 8], strides = [1, 1]} : vector<8x64xbf16> to vector<8x8xbf16>
    %cst_58 = arith.constant dense<0.000000e+00> : vector<8x8xf32>
    %169 = tpu.matmul %167, %168, %cst_58 {dimension_numbers = #tpu.dot_dimension_numbers<[1], [0], [0], [1], [0, 0, 1, 1], [], []>} : vector<8x8xbf16>, vector<8x8xbf16>, vector<8x8xf32> -> vector<8x8xf32>
    %170 = arith.truncf %169 : vector<8x8xf32> to vector<8x8xbf16>
    %c0_59 = arith.constant 0 : index
    %c7 = arith.constant 7 : index
    %c0_60 = arith.constant 0 : index
    %c0_61 = arith.constant 0 : index
    %171 = vector.load %arg3[%c0_59, %c7, %c0_60, %c0_61] : memref<1x8x8x8xbf16, #tpu.memory_space<vmem>>, vector<1x1x8x8xbf16>
    %172 = vector.shape_cast %171 : vector<1x1x8x8xbf16> to vector<8x8xbf16>
    %173 = vector.shape_cast %170 : vector<8x8xbf16> to vector<1x1x8x8xbf16>
    tpu.vector_store %arg3[%c0_59, %c7, %c0_60, %c0_61], %173 {strides = array<i32>} : memref<1x8x8x8xbf16, #tpu.memory_space<vmem>>, vector<1x1x8x8xbf16>,
    return
  }
  func.func @transform_0(%arg0: i32) -> (i32, i32, i32) {
    %c0_i32 = arith.constant 0 : i32
    %c0_i32_0 = arith.constant 0 : i32
    %c0_i32_1 = arith.constant 0 : i32
    return %arg0, %c0_i32, %c0_i32_0 : i32, i32, i32
  }
  func.func @transform_1(%arg0: i32) -> (i32, i32) {
    %c0_i32 = arith.constant 0 : i32
    %c0_i32_0 = arith.constant 0 : i32
    %c0_i32_1 = arith.constant 0 : i32
    return %c0_i32, %c0_i32_0 : i32, i32
  }
  func.func @transform_2(%arg0: i32) -> (i32, i32, i32, i32) {
    %c0_i32 = arith.constant 0 : i32
    %c0_i32_0 = arith.constant 0 : i32
    %c0_i32_1 = arith.constant 0 : i32
    %c0_i32_2 = arith.constant 0 : i32
    return %arg0, %c0_i32, %c0_i32_0, %c0_i32_1 : i32, i32, i32, i32
  }
}

module attributes {stable_mosaic.version = 11 : i64} {
  func.func @_logits_kernel(%arg0: i32, %arg1: memref<8x64xf32, #tpu.memory_space<vmem>>, %arg2: memref<64x128xbf16, #tpu.memory_space<vmem>>, %arg3: memref<8x128xf32, #tpu.memory_space<vmem>>) attributes {dimension_semantics = [#tpu.dimension_semantics<parallel>], iteration_bounds = array<i64: 2>, scalar_prefetch = 0 : i64, scratch_operands = 0 : i64, tpu.core_type = #tpu.core_type<tc>, window_params = [{transform_indices = @transform_0, window_bounds = array<i64: 8, 64>}, {pipeline_mode = #tpu.pipeline_mode<synchronous>, transform_indices = @transform_1, window_bounds = array<i64: 64, 128>}, {transform_indices = @transform_2, window_bounds = array<i64: 8, 128>}]} {
    %c0 = arith.constant 0 : index
    %c0_0 = arith.constant 0 : index
    %0 = vector.load %arg1[%c0, %c0_0] : memref<8x64xf32, #tpu.memory_space<vmem>>, vector<8x64xf32>
    %1 = arith.truncf %0 : vector<8x64xf32> to vector<8x64xbf16>
    %c0_1 = arith.constant 0 : index
    %c0_2 = arith.constant 0 : index
    %2 = vector.load %arg2[%c0_1, %c0_2] : memref<64x128xbf16, #tpu.memory_space<vmem>>, vector<64x128xbf16>
    %cst = arith.constant dense<0.000000e+00> : vector<8x128xf32>
    %3 = tpu.matmul %1, %2, %cst {dimension_numbers = #tpu.dot_dimension_numbers<[1], [0], [0], [1], [0, 0, 1, 1], [], []>} : vector<8x64xbf16>, vector<64x128xbf16>, vector<8x128xf32> -> vector<8x128xf32>
    %c0_3 = arith.constant 0 : index
    %c0_4 = arith.constant 0 : index
    %4 = vector.load %arg3[%c0_3, %c0_4] : memref<8x128xf32, #tpu.memory_space<vmem>>, vector<8x128xf32>
    tpu.vector_store %arg3[%c0_3, %c0_4], %3 {strides = array<i32>} : memref<8x128xf32, #tpu.memory_space<vmem>>, vector<8x128xf32>,
    return
  }
  func.func @transform_0(%arg0: i32) -> (i32, i32) {
    %c0_i32 = arith.constant 0 : i32
    %c0_i32_0 = arith.constant 0 : i32
    return %arg0, %c0_i32 : i32, i32
  }
  func.func @transform_1(%arg0: i32) -> (i32, i32) {
    %c0_i32 = arith.constant 0 : i32
    %c0_i32_0 = arith.constant 0 : i32
    %c0_i32_1 = arith.constant 0 : i32
    return %c0_i32, %c0_i32_0 : i32, i32
  }
  func.func @transform_2(%arg0: i32) -> (i32, i32) {
    %c0_i32 = arith.constant 0 : i32
    %c0_i32_0 = arith.constant 0 : i32
    return %arg0, %c0_i32 : i32, i32
  }
}

</mosaic_0001>

<llo_original>
// kernel: transformer_forward.25
$region0: #{transformer_forward.25}
  #allocation0 [shape = 'u32[]', space=smem, size = 0x4, offset = 0x4, fixed_abs, tag = 'smem constant byte address 0x4 - core index']
  #allocation1 [shape = 'u32[72,128]{1,0:T(1,128)}', space=vmem, size = 0x9000, scoped, tag = 'internal scratch']
  %s0 = inlined_call_operand.vmem [shape: f32[16,64], index: 0, kind: input, shape index: {}]
  %s1 = inlined_call_operand.vmem [shape: bf16[64,128], index: 1, kind: input, shape index: {}]
  %s2 = inlined_call_operand.vmem [shape: f32[16,128], index: 2, kind: output, shape index: {}]
  %s3 = sld [smem:[#allocation0]]
  $region41: #{transformer_forward.25} parent=0
    _
  %s5 = ssub.s32 1, %s3
  %s6 = scalar_select 0, %s5, %s3
  loop: start=0, step=1, limit=4
  $region2: #{transformer_forward.25} parent=0 // loop_pre_header
    _
  $region3: #{transformer_forward.25} parent=0 // loop_header
    %s8 = sphi 0, %s12
    %p9 = scmp.ge.s32.totalorder %s8, 4
    %s18 = sphi 0, %s20
    %s21 = sphi 0, %s18
    %s22 = sphi 0, %s21
    %s38 = sphi 0, %s22
    %s42 = sphi 0, %s42
    %s44 = sphi 0, %s42
    %s45 = sphi 0, %s44
    %s59 = sphi 0, %s45
    %s65 = sphi 0, %s67
    %s68 = sphi 0, %s65
    %s69 = sphi 0, %s68
    %s85 = sphi 0, %s69
  $region4: #{transformer_forward.25} parent=0 // loop_header_branch
    %11 = sbr.rel (%p9) target = $region8
  $region5: #{transformer_forward.25} parent=0 // loop_body
    %s13 = ssub.s32 %s8, 1
    %s14 = ssub.s32 %s8, 2
    %s15 = sadd.s32 %s8, 1
    %s16 = ssub.s32 %s8, %s15
    %p17 = scmp.eq.s32.totalorder %s16, 0
    %s19 = sadd.s32 %s18, 1
    %s20 = scalar_select %p17, %s18, %s19
    %p23 = pneg %p17
    %p24 = scmp.eq.s32.totalorder %s8, 1
    %p25 = por %p23, %p24
    %p26 = scmp.ne.s32.totalorder %s18, %s21
    %p27 = scmp.eq.s32.totalorder %s8, 0
    %p28 = por %p26, %p27
    %p29 = scmp.ne.s32.totalorder %s18, %s21
    %p30 = scmp.eq.s32.totalorder %s13, 1
    %p31 = por %p29, %p30
    %p32 = scmp.ne.s32.totalorder %s21, %s22
    %p33 = scmp.eq.s32.totalorder %s13, 0
    %p34 = por %p32, %p33
    %p35 = scmp.ne.s32.totalorder %s21, %s22
    %p36 = scmp.eq.s32.totalorder %s14, 1
    %p37 = por %p35, %p36
    %p39 = scmp.ne.s32.totalorder %s22, %s38
    %p40 = scmp.eq.s32.totalorder %s14, 0
    %p41 = por %p39, %p40
    %s43 = sadd.s32 %s42, 1
    %p46 = scmp.eq.s32.totalorder %s8, 1
    %p47 = scmp.ne.s32.totalorder %s42, %s44
    %p48 = scmp.eq.s32.totalorder %s8, 0
    %p49 = por %p47, %p48
    %p50 = scmp.ne.s32.totalorder %s42, %s44
    %p51 = scmp.eq.s32.totalorder %s13, 1
    %p52 = por %p50, %p51
    %p53 = scmp.ne.s32.totalorder %s44, %s45
    %p54 = scmp.eq.s32.totalorder %s13, 0
    %p55 = por %p53, %p54
    %p56 = scmp.ne.s32.totalorder %s44, %s45
    %p57 = scmp.eq.s32.totalorder %s14, 1
    %p58 = por %p56, %p57
    %p60 = scmp.ne.s32.totalorder %s45, %s59
    %p61 = scmp.eq.s32.totalorder %s14, 0
    %p62 = por %p60, %p61
    %s63 = ssub.s32 %s8, %s15
    %p64 = scmp.eq.s32.totalorder %s63, 0
    %s66 = sadd.s32 %s65, 1
    %s67 = scalar_select %p64, %s65, %s66
    %p70 = pneg %p64
    %p71 = scmp.eq.s32.totalorder %s8, 1
    %p72 = por %p70, %p71
    %p73 = scmp.ne.s32.totalorder %s65, %s68
    %p74 = scmp.eq.s32.totalorder %s8, 0
    %p75 = por %p73, %p74
    %p76 = scmp.ne.s32.totalorder %s65, %s68
    %p77 = scmp.eq.s32.totalorder %s13, 1
    %p78 = por %p76, %p77
    %p79 = scmp.ne.s32.totalorder %s68, %s69
    %p80 = scmp.eq.s32.totalorder %s13, 0
    %p81 = por %p79, %p80
    %p82 = scmp.ne.s32.totalorder %s68, %s69
    %p83 = scmp.eq.s32.totalorder %s14, 1
    %p84 = por %p82, %p83
    %p86 = scmp.ne.s32.totalorder %s69, %s85
    %p87 = scmp.eq.s32.totalorder %s14, 0
    %p88 = por %p86, %p87
    %p89 = scmp.le.s32.totalorder 1, %s8
    %p90 = scmp.lt.s32.totalorder %s8, 3
    %p91 = pnand %p89, %p90
    %p92 = pneg %p91
    // Predicated region
    $region9: #{transformer_forward.25} parent=5 // pred_check
      _
    $region10: #{transformer_forward.25} parent=5 // pred_check_branch
      %94 = sbr.rel (%p91) target = $region12
    $region11: #{transformer_forward.25} parent=5 // pred_region
      %s95 = ssub.s32 %s8, 1
      // Predicated region
      $region13: #{transformer_forward.25} parent=11 // pred_check
        %p96 = pneg %p55
      $region14: #{transformer_forward.25} parent=11 // pred_check_branch
        %98 = sbr.rel (%p96) target = $region16
      $region15: #{transformer_forward.25} parent=11 // pred_region
        _
      $region16: #{transformer_forward.25} parent=11 // pred_fallthru
        _
    $region12: #{transformer_forward.25} parent=5 // pred_fallthru
      _
    %p99 = scmp.lt.s32.totalorder %s8, 2
    // Predicated region
    $region17: #{transformer_forward.25} parent=5 // pred_check
      %p100 = pneg %p99
    $region18: #{transformer_forward.25} parent=5 // pred_check_branch
      %102 = sbr.rel (%p100) target = $region20
    $region19: #{transformer_forward.25} parent=5 // pred_region
      // Predicated region
      $region21: #{transformer_forward.25} parent=19 // pred_check
        %p103 = pneg %p28
      $region22: #{transformer_forward.25} parent=19 // pred_check_branch
        %105 = sbr.rel (%p103) target = $region24
      $region23: #{transformer_forward.25} parent=19 // pred_region
        %p106 = scmp.lt.s32.totalorder %s8, 1
        %s107 = scalar_select %p106, %s8, 1
        %s108 = smul.addr %s107, 8
        %s109 = scalar_lea.vmem %s0, %s108
      $region24: #{transformer_forward.25} parent=19 // pred_fallthru
        _
    $region20: #{transformer_forward.25} parent=5 // pred_fallthru
      _
    %p110 = scmp.le.s32.totalorder 1, %s8
    %p111 = scmp.lt.s32.totalorder %s8, 3
    %p112 = pnand %p110, %p111
    %p113 = pneg %p112
    // Predicated region
    $region25: #{transformer_forward.25} parent=5 // pred_check
      _
    $region26: #{transformer_forward.25} parent=5 // pred_check_branch
      %115 = sbr.rel (%p112) target = $region28
    $region27: #{transformer_forward.25} parent=5 // pred_region
      %s116 = ssub.s32 %s8, 1
      %p117 = scmp.lt.s32.totalorder %s13, 1
      %s118 = scalar_select %p117, %s13, 1
      %s119 = smul.addr %s118, 8
      %s120 = scalar_lea.vmem %s0, %s119
      %p121 = pneg %p34
      %p122 = pneg %p31
      %p123 = pneg %p55
      %p124 = pneg %p52
      %p125 = pneg %p81
      %p126 = pneg %p78
      %p127 = scmp.lt.s32.totalorder %s13, 1
      %s128 = scalar_select %p127, %s13, 1
      %s129 = smul.addr %s128, 8
      %s130 = scalar_lea.vmem %s2, %s129
      %p131 = scmp.lt.s32.totalorder %s13, 1
      %s132 = scalar_select %p131, %s13, 1
      %s133 = smul.addr %s132, 8
      %s134 = scalar_lea.vmem %s0, %s133
      %p135 = scmp.lt.s32.totalorder %s13, 1
      %s136 = scalar_select %p135, %s13, 1
      %s137 = smul.addr %s136, 8
      %s138 = scalar_lea.vmem %s2, %s137
      %v140 = vld [vmem:[%s134] sm:$0xff]
      %v141 = vpack.c.bf16 %v140, %v140
      %v142 = vld [vmem:[%s1] sm:$0xf]
      %v143 = vld [vmem:[%s1 + $0x4] sm:$0xf]
      %v144 = vld [vmem:[%s1 + $0x8] sm:$0xf]
      %v145 = vld [vmem:[%s1 + $0xc] sm:$0xf]
      %v146 = vld [vmem:[%s1 + $0x10] sm:$0xf]
      %v147 = vld [vmem:[%s1 + $0x14] sm:$0xf]
      %v148 = vld [vmem:[%s1 + $0x18] sm:$0xf]
      %v149 = vld [vmem:[%s1 + $0x1c] sm:$0xf]
      %v158 = vunpack.c.l.b16 %v142
      %v159 = vunpack.c.l.b16 %v143
      %v160 = vunpack.c.l.b16 %v144
      %v161 = vunpack.c.l.b16 %v145
      %v162 = vunpack.c.l.b16 %v146
      %v163 = vunpack.c.l.b16 %v147
      %v164 = vunpack.c.l.b16 %v148
      %v165 = vunpack.c.l.b16 %v149
      %v166 = vpack.c.b16 %v159, %v158
      %v167 = vpack.c.b16 %v161, %v160
      %v168 = vpack.c.b16 %v163, %v162
      %v169 = vpack.c.b16 %v165, %v164
      %vm174 = vcmask 523264
      %v176 = vsel %vm174, %v141, 0
      %178 = vmatpush.bf16.msra.mxu0 0
      %179 = vmatpush.bf16.msra.mxu0 0
      %180 = vmatpush.bf16.msra.mxu0 0
      %181 = vmatpush.bf16.msra.mxu0 0
      %182 = vmatpush.bf16.msra.mxu0 %v169
      %183 = vmatpush.bf16.msra.mxu0 %v168
      %184 = vmatpush.bf16.msra.mxu0 %v167
      %185 = vmatpush.bf16.msra.mxu0 %v166
      %186 = vmatmul.bf16.gmra.mxu0 %v176
      %v187 = vpop.f32.mrf.mxu0
      %v188 = vadd.f32 0.0, %v187
      %v189 = vpop.f32.mrf.mxu0
      %190 = vdwg.mxu0
      %191 = vst [vmem:[%s138] sm:$0xff] %v188
      %p192 = scmp.lt.s32.totalorder %s13, 1
      %s193 = scalar_select %p192, %s13, 1
      %s194 = smul.addr %s193, 8
      %s195 = scalar_lea.vmem %s2, %s194
      // Predicated region
      $region29: #{transformer_forward.25} parent=27 // pred_check
        %p196 = pneg %p78
      $region30: #{transformer_forward.25} parent=27 // pred_check_branch
        %198 = sbr.rel (%p196) target = $region32
      $region31: #{transformer_forward.25} parent=27 // pred_region
        _
      $region32: #{transformer_forward.25} parent=27 // pred_fallthru
        _
    $region28: #{transformer_forward.25} parent=5 // pred_fallthru
      _
    %p199 = scmp.le.s32.totalorder 2, %s8
    // Predicated region
    $region33: #{transformer_forward.25} parent=5 // pred_check
      %p200 = pneg %p199
    $region34: #{transformer_forward.25} parent=5 // pred_check_branch
      %202 = sbr.rel (%p200) target = $region36
    $region35: #{transformer_forward.25} parent=5 // pred_region
      %s203 = ssub.s32 %s8, 2
      // Predicated region
      $region37: #{transformer_forward.25} parent=35 // pred_check
        %p204 = pneg %p84
      $region38: #{transformer_forward.25} parent=35 // pred_check_branch
        %206 = sbr.rel (%p204) target = $region40
      $region39: #{transformer_forward.25} parent=35 // pred_region
        %p207 = scmp.lt.s32.totalorder %s14, 1
        %s208 = scalar_select %p207, %s14, 1
        %s209 = smul.addr %s208, 8
        %s210 = scalar_lea.vmem %s2, %s209
      $region40: #{transformer_forward.25} parent=35 // pred_fallthru
        _
    $region36: #{transformer_forward.25} parent=5 // pred_fallthru
      _
  $region6: #{transformer_forward.25} parent=0 // loop_footer
    %s12 = sadd.s32 1, %s8
  $region7: #{transformer_forward.25} parent=0 // loop_footer_branch
    %7 = sbr.rel target = $region3
  $region8: #{transformer_forward.25} parent=0 // loop_exit
    _

// kernel: transformer_forward.14
$region0: #{transformer_forward.14}
  #allocation0 [shape = 'u32[]', space=smem, size = 0x4, offset = 0x4, fixed_abs, tag = 'smem constant byte address 0x4 - core index']
  #allocation1 [shape = 'u32[72,128]{1,0:T(1,128)}', space=vmem, size = 0x9000, scoped, tag = 'internal scratch']
  %s0 = inlined_call_operand.vmem [shape: bf16[16,64], index: 0, kind: input, shape index: {}]
  %s1 = inlined_call_operand.vmem [shape: f32[16,64], index: 1, kind: input, shape index: {}]
  %s2 = inlined_call_operand.vmem [shape: bf16[64,64], index: 2, kind: input, shape index: {}]
  %s3 = inlined_call_operand.vmem [shape: f32[1,64], index: 3, kind: input, shape index: {}]
  %s4 = inlined_call_operand.vmem [shape: f32[1,64], index: 4, kind: input, shape index: {}]
  %s5 = inlined_call_operand.vmem [shape: f32[1,64], index: 5, kind: input, shape index: {}]
  %s6 = inlined_call_operand.vmem [shape: bf16[64,256], index: 6, kind: input, shape index: {}]
  %s7 = inlined_call_operand.vmem [shape: f32[1,256], index: 7, kind: input, shape index: {}]
  %s8 = inlined_call_operand.vmem [shape: bf16[256,64], index: 8, kind: input, shape index: {}]
  %s9 = inlined_call_operand.vmem [shape: f32[1,64], index: 9, kind: input, shape index: {}]
  %s10 = inlined_call_operand.vmem [shape: f32[1,64], index: 10, kind: input, shape index: {}]
  %s11 = inlined_call_operand.vmem [shape: f32[1,64], index: 11, kind: input, shape index: {}]
  %s12 = inlined_call_operand.vmem [shape: f32[16,64], index: 12, kind: output, shape index: {}]
  %s13 = sld [smem:[#allocation0]]
  $region81: #{transformer_forward.14} parent=0
    _
  %s15 = ssub.s32 1, %s13
  %s16 = scalar_select 0, %s15, %s13
  loop: start=0, step=1, limit=4
  $region2: #{transformer_forward.14} parent=0 // loop_pre_header
    _
  $region3: #{transformer_forward.14} parent=0 // loop_header
    %s18 = sphi 0, %s22
    %p19 = scmp.ge.s32.totalorder %s18, 4
    %s28 = sphi 0, %s30
    %s31 = sphi 0, %s28
    %s32 = sphi 0, %s31
    %s48 = sphi 0, %s32
    %s54 = sphi 0, %s56
    %s57 = sphi 0, %s54
    %s58 = sphi 0, %s57
    %s74 = sphi 0, %s58
    %s78 = sphi 0, %s78
    %s80 = sphi 0, %s78
    %s81 = sphi 0, %s80
    %s95 = sphi 0, %s81
    %s99 = sphi 0, %s99
    %s101 = sphi 0, %s99
    %s102 = sphi 0, %s101
    %s116 = sphi 0, %s102
    %s120 = sphi 0, %s120
    %s122 = sphi 0, %s120
    %s123 = sphi 0, %s122
    %s137 = sphi 0, %s123
    %s141 = sphi 0, %s141
    %s143 = sphi 0, %s141
    %s144 = sphi 0, %s143
    %s158 = sphi 0, %s144
    %s162 = sphi 0, %s162
    %s164 = sphi 0, %s162
    %s165 = sphi 0, %s164
    %s179 = sphi 0, %s165
    %s183 = sphi 0, %s183
    %s185 = sphi 0, %s183
    %s186 = sphi 0, %s185
    %s200 = sphi 0, %s186
    %s204 = sphi 0, %s204
    %s206 = sphi 0, %s204
    %s207 = sphi 0, %s206
    %s221 = sphi 0, %s207
    %s225 = sphi 0, %s225
    %s227 = sphi 0, %s225
    %s228 = sphi 0, %s227
    %s242 = sphi 0, %s228
    %s246 = sphi 0, %s246
    %s248 = sphi 0, %s246
    %s249 = sphi 0, %s248
    %s263 = sphi 0, %s249
    %s267 = sphi 0, %s267
    %s269 = sphi 0, %s267
    %s270 = sphi 0, %s269
    %s284 = sphi 0, %s270
    %s290 = sphi 0, %s292
    %s293 = sphi 0, %s290
    %s294 = sphi 0, %s293
    %s310 = sphi 0, %s294
  $region4: #{transformer_forward.14} parent=0 // loop_header_branch
    %21 = sbr.rel (%p19) target = $region8
  $region5: #{transformer_forward.14} parent=0 // loop_body
    %s23 = ssub.s32 %s18, 1
    %s24 = ssub.s32 %s18, 2
    %s25 = sadd.s32 %s18, 1
    %s26 = ssub.s32 %s18, %s25
    %p27 = scmp.eq.s32.totalorder %s26, 0
    %s29 = sadd.s32 %s28, 1
    %s30 = scalar_select %p27, %s28, %s29
    %p33 = pneg %p27
    %p34 = scmp.eq.s32.totalorder %s18, 1
    %p35 = por %p33, %p34
    %p36 = scmp.ne.s32.totalorder %s28, %s31
    %p37 = scmp.eq.s32.totalorder %s18, 0
    %p38 = por %p36, %p37
    %p39 = scmp.ne.s32.totalorder %s28, %s31
    %p40 = scmp.eq.s32.totalorder %s23, 1
    %p41 = por %p39, %p40
    %p42 = scmp.ne.s32.totalorder %s31, %s32
    %p43 = scmp.eq.s32.totalorder %s23, 0
    %p44 = por %p42, %p43
    %p45 = scmp.ne.s32.totalorder %s31, %s32
    %p46 = scmp.eq.s32.totalorder %s24, 1
    %p47 = por %p45, %p46
    %p49 = scmp.ne.s32.totalorder %s32, %s48
    %p50 = scmp.eq.s32.totalorder %s24, 0
    %p51 = por %p49, %p50
    %s52 = ssub.s32 %s18, %s25
    %p53 = scmp.eq.s32.totalorder %s52, 0
    %s55 = sadd.s32 %s54, 1
    %s56 = scalar_select %p53, %s54, %s55
    %p59 = pneg %p53
    %p60 = scmp.eq.s32.totalorder %s18, 1
    %p61 = por %p59, %p60
    %p62 = scmp.ne.s32.totalorder %s54, %s57
    %p63 = scmp.eq.s32.totalorder %s18, 0
    %p64 = por %p62, %p63
    %p65 = scmp.ne.s32.totalorder %s54, %s57
    %p66 = scmp.eq.s32.totalorder %s23, 1
    %p67 = por %p65, %p66
    %p68 = scmp.ne.s32.totalorder %s57, %s58
    %p69 = scmp.eq.s32.totalorder %s23, 0
    %p70 = por %p68, %p69
    %p71 = scmp.ne.s32.totalorder %s57, %s58
    %p72 = scmp.eq.s32.totalorder %s24, 1
    %p73 = por %p71, %p72
    %p75 = scmp.ne.s32.totalorder %s58, %s74
    %p76 = scmp.eq.s32.totalorder %s24, 0
    %p77 = por %p75, %p76
    %s79 = sadd.s32 %s78, 1
    %p82 = scmp.eq.s32.totalorder %s18, 1
    %p83 = scmp.ne.s32.totalorder %s78, %s80
    %p84 = scmp.eq.s32.totalorder %s18, 0
    %p85 = por %p83, %p84
    %p86 = scmp.ne.s32.totalorder %s78, %s80
    %p87 = scmp.eq.s32.totalorder %s23, 1
    %p88 = por %p86, %p87
    %p89 = scmp.ne.s32.totalorder %s80, %s81
    %p90 = scmp.eq.s32.totalorder %s23, 0
    %p91 = por %p89, %p90
    %p92 = scmp.ne.s32.totalorder %s80, %s81
    %p93 = scmp.eq.s32.totalorder %s24, 1
    %p94 = por %p92, %p93
    %p96 = scmp.ne.s32.totalorder %s81, %s95
    %p97 = scmp.eq.s32.totalorder %s24, 0
    %p98 = por %p96, %p97
    %s100 = sadd.s32 %s99, 1
    %p103 = scmp.eq.s32.totalorder %s18, 1
    %p104 = scmp.ne.s32.totalorder %s99, %s101
    %p105 = scmp.eq.s32.totalorder %s18, 0
    %p106 = por %p104, %p105
    %p107 = scmp.ne.s32.totalorder %s99, %s101
    %p108 = scmp.eq.s32.totalorder %s23, 1
    %p109 = por %p107, %p108
    %p110 = scmp.ne.s32.totalorder %s101, %s102
    %p111 = scmp.eq.s32.totalorder %s23, 0
    %p112 = por %p110, %p111
    %p113 = scmp.ne.s32.totalorder %s101, %s102
    %p114 = scmp.eq.s32.totalorder %s24, 1
    %p115 = por %p113, %p114
    %p117 = scmp.ne.s32.totalorder %s102, %s116
    %p118 = scmp.eq.s32.totalorder %s24, 0
    %p119 = por %p117, %p118
    %s121 = sadd.s32 %s120, 1
    %p124 = scmp.eq.s32.totalorder %s18, 1
    %p125 = scmp.ne.s32.totalorder %s120, %s122
    %p126 = scmp.eq.s32.totalorder %s18, 0
    %p127 = por %p125, %p126
    %p128 = scmp.ne.s32.totalorder %s120, %s122
    %p129 = scmp.eq.s32.totalorder %s23, 1
    %p130 = por %p128, %p129
    %p131 = scmp.ne.s32.totalorder %s122, %s123
    %p132 = scmp.eq.s32.totalorder %s23, 0
    %p133 = por %p131, %p132
    %p134 = scmp.ne.s32.totalorder %s122, %s123
    %p135 = scmp.eq.s32.totalorder %s24, 1
    %p136 = por %p134, %p135
    %p138 = scmp.ne.s32.totalorder %s123, %s137
    %p139 = scmp.eq.s32.totalorder %s24, 0
    %p140 = por %p138, %p139
    %s142 = sadd.s32 %s141, 1
    %p145 = scmp.eq.s32.totalorder %s18, 1
    %p146 = scmp.ne.s32.totalorder %s141, %s143
    %p147 = scmp.eq.s32.totalorder %s18, 0
    %p148 = por %p146, %p147
    %p149 = scmp.ne.s32.totalorder %s141, %s143
    %p150 = scmp.eq.s32.totalorder %s23, 1
    %p151 = por %p149, %p150
    %p152 = scmp.ne.s32.totalorder %s143, %s144
    %p153 = scmp.eq.s32.totalorder %s23, 0
    %p154 = por %p152, %p153
    %p155 = scmp.ne.s32.totalorder %s143, %s144
    %p156 = scmp.eq.s32.totalorder %s24, 1
    %p157 = por %p155, %p156
    %p159 = scmp.ne.s32.totalorder %s144, %s158
    %p160 = scmp.eq.s32.totalorder %s24, 0
    %p161 = por %p159, %p160
    %s163 = sadd.s32 %s162, 1
    %p166 = scmp.eq.s32.totalorder %s18, 1
    %p167 = scmp.ne.s32.totalorder %s162, %s164
    %p168 = scmp.eq.s32.totalorder %s18, 0
    %p169 = por %p167, %p168
    %p170 = scmp.ne.s32.totalorder %s162, %s164
    %p171 = scmp.eq.s32.totalorder %s23, 1
    %p172 = por %p170, %p171
    %p173 = scmp.ne.s32.totalorder %s164, %s165
    %p174 = scmp.eq.s32.totalorder %s23, 0
    %p175 = por %p173, %p174
    %p176 = scmp.ne.s32.totalorder %s164, %s165
    %p177 = scmp.eq.s32.totalorder %s24, 1
    %p178 = por %p176, %p177
    %p180 = scmp.ne.s32.totalorder %s165, %s179
    %p181 = scmp.eq.s32.totalorder %s24, 0
    %p182 = por %p180, %p181
    %s184 = sadd.s32 %s183, 1
    %p187 = scmp.eq.s32.totalorder %s18, 1
    %p188 = scmp.ne.s32.totalorder %s183, %s185
    %p189 = scmp.eq.s32.totalorder %s18, 0
    %p190 = por %p188, %p189
    %p191 = scmp.ne.s32.totalorder %s183, %s185
    %p192 = scmp.eq.s32.totalorder %s23, 1
    %p193 = por %p191, %p192
    %p194 = scmp.ne.s32.totalorder %s185, %s186
    %p195 = scmp.eq.s32.totalorder %s23, 0
    %p196 = por %p194, %p195
    %p197 = scmp.ne.s32.totalorder %s185, %s186
    %p198 = scmp.eq.s32.totalorder %s24, 1
    %p199 = por %p197, %p198
    %p201 = scmp.ne.s32.totalorder %s186, %s200
    %p202 = scmp.eq.s32.totalorder %s24, 0
    %p203 = por %p201, %p202
    %s205 = sadd.s32 %s204, 1
    %p208 = scmp.eq.s32.totalorder %s18, 1
    %p209 = scmp.ne.s32.totalorder %s204, %s206
    %p210 = scmp.eq.s32.totalorder %s18, 0
    %p211 = por %p209, %p210
    %p212 = scmp.ne.s32.totalorder %s204, %s206
    %p213 = scmp.eq.s32.totalorder %s23, 1
    %p214 = por %p212, %p213
    %p215 = scmp.ne.s32.totalorder %s206, %s207
    %p216 = scmp.eq.s32.totalorder %s23, 0
    %p217 = por %p215, %p216
    %p218 = scmp.ne.s32.totalorder %s206, %s207
    %p219 = scmp.eq.s32.totalorder %s24, 1
    %p220 = por %p218, %p219
    %p222 = scmp.ne.s32.totalorder %s207, %s221
    %p223 = scmp.eq.s32.totalorder %s24, 0
    %p224 = por %p222, %p223
    %s226 = sadd.s32 %s225, 1
    %p229 = scmp.eq.s32.totalorder %s18, 1
    %p230 = scmp.ne.s32.totalorder %s225, %s227
    %p231 = scmp.eq.s32.totalorder %s18, 0
    %p232 = por %p230, %p231
    %p233 = scmp.ne.s32.totalorder %s225, %s227
    %p234 = scmp.eq.s32.totalorder %s23, 1
    %p235 = por %p233, %p234
    %p236 = scmp.ne.s32.totalorder %s227, %s228
    %p237 = scmp.eq.s32.totalorder %s23, 0
    %p238 = por %p236, %p237
    %p239 = scmp.ne.s32.totalorder %s227, %s228
    %p240 = scmp.eq.s32.totalorder %s24, 1
    %p241 = por %p239, %p240
    %p243 = scmp.ne.s32.totalorder %s228, %s242
    %p244 = scmp.eq.s32.totalorder %s24, 0
    %p245 = por %p243, %p244
    %s247 = sadd.s32 %s246, 1
    %p250 = scmp.eq.s32.totalorder %s18, 1
    %p251 = scmp.ne.s32.totalorder %s246, %s248
    %p252 = scmp.eq.s32.totalorder %s18, 0
    %p253 = por %p251, %p252
    %p254 = scmp.ne.s32.totalorder %s246, %s248
    %p255 = scmp.eq.s32.totalorder %s23, 1
    %p256 = por %p254, %p255
    %p257 = scmp.ne.s32.totalorder %s248, %s249
    %p258 = scmp.eq.s32.totalorder %s23, 0
    %p259 = por %p257, %p258
    %p260 = scmp.ne.s32.totalorder %s248, %s249
    %p261 = scmp.eq.s32.totalorder %s24, 1
    %p262 = por %p260, %p261
    %p264 = scmp.ne.s32.totalorder %s249, %s263
    %p265 = scmp.eq.s32.totalorder %s24, 0
    %p266 = por %p264, %p265
    %s268 = sadd.s32 %s267, 1
    %p271 = scmp.eq.s32.totalorder %s18, 1
    %p272 = scmp.ne.s32.totalorder %s267, %s269
    %p273 = scmp.eq.s32.totalorder %s18, 0
    %p274 = por %p272, %p273
    %p275 = scmp.ne.s32.totalorder %s267, %s269
    %p276 = scmp.eq.s32.totalorder %s23, 1
    %p277 = por %p275, %p276
    %p278 = scmp.ne.s32.totalorder %s269, %s270
    %p279 = scmp.eq.s32.totalorder %s23, 0
    %p280 = por %p278, %p279
    %p281 = scmp.ne.s32.totalorder %s269, %s270
    %p282 = scmp.eq.s32.totalorder %s24, 1
    %p283 = por %p281, %p282
    %p285 = scmp.ne.s32.totalorder %s270, %s284
    %p286 = scmp.eq.s32.totalorder %s24, 0
    %p287 = por %p285, %p286
    %s288 = ssub.s32 %s18, %s25
    %p289 = scmp.eq.s32.totalorder %s288, 0
    %s291 = sadd.s32 %s290, 1
    %s292 = scalar_select %p289, %s290, %s291
    %p295 = pneg %p289
    %p296 = scmp.eq.s32.totalorder %s18, 1
    %p297 = por %p295, %p296
    %p298 = scmp.ne.s32.totalorder %s290, %s293
    %p299 = scmp.eq.s32.totalorder %s18, 0
    %p300 = por %p298, %p299
    %p301 = scmp.ne.s32.totalorder %s290, %s293
    %p302 = scmp.eq.s32.totalorder %s23, 1
    %p303 = por %p301, %p302
    %p304 = scmp.ne.s32.totalorder %s293, %s294
    %p305 = scmp.eq.s32.totalorder %s23, 0
    %p306 = por %p304, %p305
    %p307 = scmp.ne.s32.totalorder %s293, %s294
    %p308 = scmp.eq.s32.totalorder %s24, 1
    %p309 = por %p307, %p308
    %p311 = scmp.ne.s32.totalorder %s294, %s310
    %p312 = scmp.eq.s32.totalorder %s24, 0
    %p313 = por %p311, %p312
    %p314 = scmp.le.s32.totalorder 1, %s18
    %p315 = scmp.lt.s32.totalorder %s18, 3
    %p316 = pnand %p314, %p315
    %p317 = pneg %p316
    // Predicated region
    $region9: #{transformer_forward.14} parent=5 // pred_check
      _
    $region10: #{transformer_forward.14} parent=5 // pred_check_branch
      %319 = sbr.rel (%p316) target = $region12
    $region11: #{transformer_forward.14} parent=5 // pred_region
      %s320 = ssub.s32 %s18, 1
      // Predicated region
      $region13: #{transformer_forward.14} parent=11 // pred_check
        %p321 = pneg %p91
      $region14: #{transformer_forward.14} parent=11 // pred_check_branch
        %323 = sbr.rel (%p321) target = $region16
      $region15: #{transformer_forward.14} parent=11 // pred_region
        _
      $region16: #{transformer_forward.14} parent=11 // pred_fallthru
        _
      // Predicated region
      $region17: #{transformer_forward.14} parent=11 // pred_check
        %p324 = pneg %p112
      $region18: #{transformer_forward.14} parent=11 // pred_check_branch
        %326 = sbr.rel (%p324) target = $region20
      $region19: #{transformer_forward.14} parent=11 // pred_region
        _
      $region20: #{transformer_forward.14} parent=11 // pred_fallthru
        _
      // Predicated region
      $region21: #{transformer_forward.14} parent=11 // pred_check
        %p327 = pneg %p133
      $region22: #{transformer_forward.14} parent=11 // pred_check_branch
        %329 = sbr.rel (%p327) target = $region24
      $region23: #{transformer_forward.14} parent=11 // pred_region
        _
      $region24: #{transformer_forward.14} parent=11 // pred_fallthru
        _
      // Predicated region
      $region25: #{transformer_forward.14} parent=11 // pred_check
        %p330 = pneg %p154
      $region26: #{transformer_forward.14} parent=11 // pred_check_branch
        %332 = sbr.rel (%p330) target = $region28
      $region27: #{transformer_forward.14} parent=11 // pred_region
        _
      $region28: #{transformer_forward.14} parent=11 // pred_fallthru
        _
      // Predicated region
      $region29: #{transformer_forward.14} parent=11 // pred_check
        %p333 = pneg %p175
      $region30: #{transformer_forward.14} parent=11 // pred_check_branch
        %335 = sbr.rel (%p333) target = $region32
      $region31: #{transformer_forward.14} parent=11 // pred_region
        _
      $region32: #{transformer_forward.14} parent=11 // pred_fallthru
        _
      // Predicated region
      $region33: #{transformer_forward.14} parent=11 // pred_check
        %p336 = pneg %p196
      $region34: #{transformer_forward.14} parent=11 // pred_check_branch
        %338 = sbr.rel (%p336) target = $region36
      $region35: #{transformer_forward.14} parent=11 // pred_region
        _
      $region36: #{transformer_forward.14} parent=11 // pred_fallthru
        _
      // Predicated region
      $region37: #{transformer_forward.14} parent=11 // pred_check
        %p339 = pneg %p217
      $region38: #{transformer_forward.14} parent=11 // pred_check_branch
        %341 = sbr.rel (%p339) target = $region40
      $region39: #{transformer_forward.14} parent=11 // pred_region
        _
      $region40: #{transformer_forward.14} parent=11 // pred_fallthru
        _
      // Predicated region
      $region41: #{transformer_forward.14} parent=11 // pred_check
        %p342 = pneg %p238
      $region42: #{transformer_forward.14} parent=11 // pred_check_branch
        %344 = sbr.rel (%p342) target = $region44
      $region43: #{transformer_forward.14} parent=11 // pred_region
        _
      $region44: #{transformer_forward.14} parent=11 // pred_fallthru
        _
      // Predicated region
      $region45: #{transformer_forward.14} parent=11 // pred_check
        %p345 = pneg %p259
      $region46: #{transformer_forward.14} parent=11 // pred_check_branch
        %347 = sbr.rel (%p345) target = $region48
      $region47: #{transformer_forward.14} parent=11 // pred_region
        _
      $region48: #{transformer_forward.14} parent=11 // pred_fallthru
        _
      // Predicated region
      $region49: #{transformer_forward.14} parent=11 // pred_check
        %p348 = pneg %p280
      $region50: #{transformer_forward.14} parent=11 // pred_check_branch
        %350 = sbr.rel (%p348) target = $region52
      $region51: #{transformer_forward.14} parent=11 // pred_region
        _
      $region52: #{transformer_forward.14} parent=11 // pred_fallthru
        _
    $region12: #{transformer_forward.14} parent=5 // pred_fallthru
      _
    %p351 = scmp.lt.s32.totalorder %s18, 2
    // Predicated region
    $region53: #{transformer_forward.14} parent=5 // pred_check
      %p352 = pneg %p351
    $region54: #{transformer_forward.14} parent=5 // pred_check_branch
      %354 = sbr.rel (%p352) target = $region56
    $region55: #{transformer_forward.14} parent=5 // pred_region
      // Predicated region
      $region57: #{transformer_forward.14} parent=55 // pred_check
        %p355 = pneg %p38
      $region58: #{transformer_forward.14} parent=55 // pred_check_branch
        %357 = sbr.rel (%p355) target = $region60
      $region59: #{transformer_forward.14} parent=55 // pred_region
        %p358 = scmp.lt.s32.totalorder %s18, 1
        %s359 = scalar_select %p358, %s18, 1
        %s360 = smul.addr %s359, 4
        %s361 = scalar_lea.vmem %s0, %s360
      $region60: #{transformer_forward.14} parent=55 // pred_fallthru
        _
      // Predicated region
      $region61: #{transformer_forward.14} parent=55 // pred_check
        %p362 = pneg %p64
      $region62: #{transformer_forward.14} parent=55 // pred_check_branch
        %364 = sbr.rel (%p362) target = $region64
      $region63: #{transformer_forward.14} parent=55 // pred_region
        %p365 = scmp.lt.s32.totalorder %s18, 1
        %s366 = scalar_select %p365, %s18, 1
        %s367 = smul.addr %s366, 8
        %s368 = scalar_lea.vmem %s1, %s367
      $region64: #{transformer_forward.14} parent=55 // pred_fallthru
        _
    $region56: #{transformer_forward.14} parent=5 // pred_fallthru
      _
    %p369 = scmp.le.s32.totalorder 1, %s18
    %p370 = scmp.lt.s32.totalorder %s18, 3
    %p371 = pnand %p369, %p370
    %p372 = pneg %p371
    // Predicated region
    $region65: #{transformer_forward.14} parent=5 // pred_check
      _
    $region66: #{transformer_forward.14} parent=5 // pred_check_branch
      %374 = sbr.rel (%p371) target = $region68
    $region67: #{transformer_forward.14} parent=5 // pred_region
      %s375 = ssub.s32 %s18, 1
      %p376 = scmp.lt.s32.totalorder %s23, 1
      %s377 = scalar_select %p376, %s23, 1
      %s378 = smul.addr %s377, 4
      %s379 = scalar_lea.vmem %s0, %s378
      %p380 = pneg %p44
      %p381 = pneg %p41
      %p382 = scmp.lt.s32.totalorder %s23, 1
      %s383 = scalar_select %p382, %s23, 1
      %s384 = smul.addr %s383, 8
      %s385 = scalar_lea.vmem %s1, %s384
      %p386 = pneg %p70
      %p387 = pneg %p67
      %p388 = pneg %p91
      %p389 = pneg %p88
      %p390 = pneg %p112
      %p391 = pneg %p109
      %p392 = pneg %p133
      %p393 = pneg %p130
      %p394 = pneg %p154
      %p395 = pneg %p151
      %p396 = pneg %p175
      %p397 = pneg %p172
      %p398 = pneg %p196
      %p399 = pneg %p193
      %p400 = pneg %p217
      %p401 = pneg %p214
      %p402 = pneg %p238
      %p403 = pneg %p235
      %p404 = pneg %p259
      %p405 = pneg %p256
      %p406 = pneg %p280
      %p407 = pneg %p277
      %p408 = pneg %p306
      %p409 = pneg %p303
      %p410 = scmp.lt.s32.totalorder %s23, 1
      %s411 = scalar_select %p410, %s23, 1
      %s412 = smul.addr %s411, 8
      %s413 = scalar_lea.vmem %s12, %s412
      %p414 = scmp.lt.s32.totalorder %s23, 1
      %s415 = scalar_select %p414, %s23, 1
      %s416 = smul.addr %s415, 4
      %s417 = scalar_lea.vmem %s0, %s416
      %p418 = scmp.lt.s32.totalorder %s23, 1
      %s419 = scalar_select %p418, %s23, 1
      %s420 = smul.addr %s419, 8
      %s421 = scalar_lea.vmem %s1, %s420
      %p422 = scmp.lt.s32.totalorder %s23, 1
      %s423 = scalar_select %p422, %s23, 1
      %s424 = smul.addr %s423, 8
      %s425 = scalar_lea.vmem %s12, %s424
      %v427 = vld [vmem:[%s421] sm:$0xff]
      %v428 = vld [vmem:[%s417] sm:$0xf]
      %v429 = vld [vmem:[%s2] sm:$0xf]
      %v430 = vld [vmem:[%s2 + $0x4] sm:$0xf]
      %v431 = vld [vmem:[%s2 + $0x8] sm:$0xf]
      %v432 = vld [vmem:[%s2 + $0xc] sm:$0xf]
      %v433 = vld [vmem:[%s2 + $0x10] sm:$0xf]
      %v434 = vld [vmem:[%s2 + $0x14] sm:$0xf]
      %v435 = vld [vmem:[%s2 + $0x18] sm:$0xf]
      %v436 = vld [vmem:[%s2 + $0x1c] sm:$0xf]
      %v437 = vld [vmem:[%s3] sm:$0x1]
      %v439 = vperm.slane %v437, 0
      %v449 = vunpack.c.l.b16 %v429
      %v450 = vunpack.c.l.b16 %v430
      %v451 = vunpack.c.l.b16 %v431
      %v452 = vunpack.c.l.b16 %v432
      %v453 = vunpack.c.l.b16 %v433
      %v454 = vunpack.c.l.b16 %v434
      %v455 = vunpack.c.l.b16 %v435
      %v456 = vunpack.c.l.b16 %v436
      %v457 = vpack.c.b16 %v450, %v449
      %v458 = vpack.c.b16 %v452, %v451
      %v459 = vpack.c.b16 %v454, %v453
      %v460 = vpack.c.b16 %v456, %v455
      %vm465 = vcmask 523264
      %v467 = vsel %vm465, %v428, 0
      %469 = vmatpush.bf16.msra.mxu0 0
      %470 = vmatpush.bf16.msra.mxu0 0
      %471 = vmatpush.bf16.msra.mxu0 0
      %472 = vmatpush.bf16.msra.mxu0 0
      %473 = vmatpush.bf16.msra.mxu0 %v460
      %474 = vmatpush.bf16.msra.mxu0 %v459
      %475 = vmatpush.bf16.msra.mxu0 %v458
      %476 = vmatpush.bf16.msra.mxu0 %v457
      %477 = vmatmul.bf16.gmra.mxu0 %v467
      %v478 = vpop.f32.mrf.mxu0
      %v479 = vadd.f32 %v439, %v478
      %v480 = vpop.f32.mrf.mxu0
      %481 = vdwg.mxu0
      %v482 = vadd.f32 %v479, %v427
      %v483 = vsel %vm465, %v482, 0.0
      %484 = vadd.xlane.f32.xlu0 %v483
      %v485 = vpop.xlane.xlu0 %484
      %v486 = vrcp.pop 64.0
      %v487 = vmul.f32 64.0, %v486
      %v488 = vsub.f32 1.0, %v487
      %v489 = vmul.f32 %v486, %v488
      %v490 = vadd.f32 %v486, %v489
      %vm491 = vweird.f32 %v486
      %v492 = vsel %vm491, %v486, %v490
      %v493 = vmul.f32 %v485, %v492
      %v494 = vsub.f32 %v482, %v493
      %v495 = vmul.f32 %v494, %v494
      %v496 = vsel %vm465, %v495, 0.0
      %497 = vadd.xlane.f32.xlu0 %v496
      %v498 = vpop.xlane.xlu0 %497
      %v499 = vmul.f32 %v498, %v492
      %v500 = vadd.f32 %v499, 1e-05
      %v501 = vrsqrt.pop %v500
      %v502 = vmul.f32 %v501, %v500
      %v503 = vmul.f32 %v502, %v501
      %v504 = vmul.f32 0.5, %v503
      %v505 = vsub.f32 1.5, %v504
      %v506 = vmul.f32 %v501, %v505
      %vm507 = vweird.f32 %v500
      %vm508 = vweird.f32 %v501
      %vm509 = vmor %vm507, %vm508
      %v510 = vsel %vm509, %v501, %v506
      %v511 = vmul.f32 %v494, %v510
      %v512 = vld [vmem:[%s4] sm:$0x1]
      %v514 = vperm.slane %v512, 0
      %v516 = vmul.f32 %v511, %v514
      %v517 = vld [vmem:[%s5] sm:$0x1]
      %v519 = vperm.slane %v517, 0
      %v521 = vadd.f32 %v516, %v519
      %v522 = vpack.c.bf16 %v521, %v521
      %v523 = vld [vmem:[%s6] sm:$0xff]
      %v524 = vld [vmem:[%s6 + $0x8] sm:$0xff]
      %v525 = vld [vmem:[%s6 + $0x10] sm:$0xff]
      %v526 = vld [vmem:[%s6 + $0x18] sm:$0xff]
      %v527 = vld [vmem:[%s6 + $0x20] sm:$0xff]
      %v528 = vld [vmem:[%s6 + $0x28] sm:$0xff]
      %v529 = vld [vmem:[%s6 + $0x30] sm:$0xff]
      %v530 = vld [vmem:[%s6 + $0x38] sm:$0xff]
      %v531 = vld [vmem:[%s7] sm:$0x3]
      %v533 = vperm.slane %v531, 0
      %v534 = vperm.slane %v531, 1
      %v545 = vunpack.c.l.b16 %v523
      %v546 = vunpack.c.h.b16 %v523
      %v547 = vunpack.c.l.b16 %v524
      %v548 = vunpack.c.h.b16 %v524
      %v549 = vunpack.c.l.b16 %v525
      %v550 = vunpack.c.h.b16 %v525
      %v551 = vunpack.c.l.b16 %v526
      %v552 = vunpack.c.h.b16 %v526
      %v553 = vunpack.c.l.b16 %v527
      %v554 = vunpack.c.h.b16 %v527
      %v555 = vunpack.c.l.b16 %v528
      %v556 = vunpack.c.h.b16 %v528
      %v557 = vunpack.c.l.b16 %v529
      %v558 = vunpack.c.h.b16 %v529
      %v559 = vunpack.c.l.b16 %v530
      %v560 = vunpack.c.h.b16 %v530
      %v561 = vpack.c.b16 %v547, %v545
      %v562 = vpack.c.b16 %v548, %v546
      %v563 = vpack.c.b16 %v551, %v549
      %v564 = vpack.c.b16 %v552, %v550
      %v565 = vpack.c.b16 %v555, %v553
      %v566 = vpack.c.b16 %v556, %v554
      %v567 = vpack.c.b16 %v559, %v557
      %v568 = vpack.c.b16 %v560, %v558
      %v578 = vsel %vm465, %v522, 0
      %580 = vmatpush.bf16.msra.mxu0 0
      %581 = vmatpush.bf16.msra.mxu0 0
      %582 = vmatpush.bf16.msra.mxu0 0
      %583 = vmatpush.bf16.msra.mxu0 0
      %584 = vmatpush.bf16.msra.mxu0 %v567
      %585 = vmatpush.bf16.msra.mxu0 %v565
      %586 = vmatpush.bf16.msra.mxu0 %v563
      %587 = vmatpush.bf16.msra.mxu0 %v561
      %588 = vmatmul.bf16.gmra.mxu0 %v578
      %v589 = vpop.f32.mrf.mxu0
      %v590 = vadd.f32 %v533, %v589
      %v591 = vpop.f32.mrf.mxu0
      %592 = vdwg.mxu0
      %593 = vmatpush.bf16.msra.mxu0 0
      %594 = vmatpush.bf16.msra.mxu0 0
      %595 = vmatpush.bf16.msra.mxu0 0
      %596 = vmatpush.bf16.msra.mxu0 0
      %597 = vmatpush.bf16.msra.mxu0 %v568
      %598 = vmatpush.bf16.msra.mxu0 %v566
      %599 = vmatpush.bf16.msra.mxu0 %v564
      %600 = vmatpush.bf16.msra.mxu0 %v562
      %601 = vmatmul.bf16.gmra.mxu0 %v578
      %v602 = vpop.f32.mrf.mxu0
      %v603 = vadd.f32 %v534, %v602
      %v604 = vpop.f32.mrf.mxu0
      %605 = vdwg.mxu0
      %v606 = vmax.f32 %v590, 0.0
      %v607 = vmax.f32 %v603, 0.0
      %v608 = vpack.c.bf16 %v606, %v606
      %v609 = vpack.c.bf16 %v607, %v607
      %v610 = vld [vmem:[%s8] sm:$0xf]
      %v611 = vld [vmem:[%s8 + $0x4] sm:$0xf]
      %v612 = vld [vmem:[%s8 + $0x8] sm:$0xf]
      %v613 = vld [vmem:[%s8 + $0xc] sm:$0xf]
      %v614 = vld [vmem:[%s8 + $0x10] sm:$0xf]
      %v615 = vld [vmem:[%s8 + $0x14] sm:$0xf]
      %v616 = vld [vmem:[%s8 + $0x18] sm:$0xf]
      %v617 = vld [vmem:[%s8 + $0x1c] sm:$0xf]
      %v618 = vld [vmem:[%s8 + $0x20] sm:$0xf]
      %v619 = vld [vmem:[%s8 + $0x24] sm:$0xf]
      %v620 = vld [vmem:[%s8 + $0x28] sm:$0xf]
      %v621 = vld [vmem:[%s8 + $0x2c] sm:$0xf]
      %v622 = vld [vmem:[%s8 + $0x30] sm:$0xf]
      %v623 = vld [vmem:[%s8 + $0x34] sm:$0xf]
      %v624 = vld [vmem:[%s8 + $0x38] sm:$0xf]
      %v625 = vld [vmem:[%s8 + $0x3c] sm:$0xf]
      %v626 = vld [vmem:[%s8 + $0x40] sm:$0xf]
      %v627 = vld [vmem:[%s8 + $0x44] sm:$0xf]
      %v628 = vld [vmem:[%s8 + $0x48] sm:$0xf]
      %v629 = vld [vmem:[%s8 + $0x4c] sm:$0xf]
      %v630 = vld [vmem:[%s8 + $0x50] sm:$0xf]
      %v631 = vld [vmem:[%s8 + $0x54] sm:$0xf]
      %v632 = vld [vmem:[%s8 + $0x58] sm:$0xf]
      %v633 = vld [vmem:[%s8 + $0x5c] sm:$0xf]
      %v634 = vld [vmem:[%s8 + $0x60] sm:$0xf]
      %v635 = vld [vmem:[%s8 + $0x64] sm:$0xf]
      %v636 = vld [vmem:[%s8 + $0x68] sm:$0xf]
      %v637 = vld [vmem:[%s8 + $0x6c] sm:$0xf]
      %v638 = vld [vmem:[%s8 + $0x70] sm:$0xf]
      %v639 = vld [vmem:[%s8 + $0x74] sm:$0xf]
      %v640 = vld [vmem:[%s8 + $0x78] sm:$0xf]
      %v641 = vld [vmem:[%s8 + $0x7c] sm:$0xf]
      %v642 = vld [vmem:[%s9] sm:$0x1]
      %v644 = vperm.slane %v642, 0
      %v678 = vunpack.c.l.b16 %v610
      %v679 = vunpack.c.l.b16 %v611
      %v680 = vunpack.c.l.b16 %v612
      %v681 = vunpack.c.l.b16 %v613
      %v682 = vunpack.c.l.b16 %v614
      %v683 = vunpack.c.l.b16 %v615
      %v684 = vunpack.c.l.b16 %v616
      %v685 = vunpack.c.l.b16 %v617
      %v686 = vunpack.c.l.b16 %v618
      %v687 = vunpack.c.l.b16 %v619
      %v688 = vunpack.c.l.b16 %v620
      %v689 = vunpack.c.l.b16 %v621
      %v690 = vunpack.c.l.b16 %v622
      %v691 = vunpack.c.l.b16 %v623
      %v692 = vunpack.c.l.b16 %v624
      %v693 = vunpack.c.l.b16 %v625
      %v694 = vunpack.c.l.b16 %v626
      %v695 = vunpack.c.l.b16 %v627
      %v696 = vunpack.c.l.b16 %v628
      %v697 = vunpack.c.l.b16 %v629
      %v698 = vunpack.c.l.b16 %v630
      %v699 = vunpack.c.l.b16 %v631
      %v700 = vunpack.c.l.b16 %v632
      %v701 = vunpack.c.l.b16 %v633
      %v702 = vunpack.c.l.b16 %v634
      %v703 = vunpack.c.l.b16 %v635
      %v704 = vunpack.c.l.b16 %v636
      %v705 = vunpack.c.l.b16 %v637
      %v706 = vunpack.c.l.b16 %v638
      %v707 = vunpack.c.l.b16 %v639
      %v708 = vunpack.c.l.b16 %v640
      %v709 = vunpack.c.l.b16 %v641
      %v710 = vpack.c.b16 %v679, %v678
      %v711 = vpack.c.b16 %v681, %v680
      %v712 = vpack.c.b16 %v683, %v682
      %v713 = vpack.c.b16 %v685, %v684
      %v714 = vpack.c.b16 %v687, %v686
      %v715 = vpack.c.b16 %v689, %v688
      %v716 = vpack.c.b16 %v691, %v690
      %v717 = vpack.c.b16 %v693, %v692
      %v718 = vpack.c.b16 %v695, %v694
      %v719 = vpack.c.b16 %v697, %v696
      %v720 = vpack.c.b16 %v699, %v698
      %v721 = vpack.c.b16 %v701, %v700
      %v722 = vpack.c.b16 %v703, %v702
      %v723 = vpack.c.b16 %v705, %v704
      %v724 = vpack.c.b16 %v707, %v706
      %v725 = vpack.c.b16 %v709, %v708
      %742 = vmatpush.bf16.msra.mxu0 %v717
      %743 = vmatpush.bf16.msra.mxu0 %v716
      %744 = vmatpush.bf16.msra.mxu0 %v715
      %745 = vmatpush.bf16.msra.mxu0 %v714
      %746 = vmatpush.bf16.msra.mxu0 %v713
      %747 = vmatpush.bf16.msra.mxu0 %v712
      %748 = vmatpush.bf16.msra.mxu0 %v711
      %749 = vmatpush.bf16.msra.mxu0 %v710
      %750 = vmatmul.bf16.gmra.mxu0 %v608
      %v751 = vpop.f32.mrf.mxu0
      %v752 = vadd.f32 %v644, %v751
      %v753 = vpop.f32.mrf.mxu0
      %754 = vdwg.mxu0
      %755 = vmatpush.bf16.msra.mxu0 %v725
      %756 = vmatpush.bf16.msra.mxu0 %v724
      %757 = vmatpush.bf16.msra.mxu0 %v723
      %758 = vmatpush.bf16.msra.mxu0 %v722
      %759 = vmatpush.bf16.msra.mxu0 %v721
      %760 = vmatpush.bf16.msra.mxu0 %v720
      %761 = vmatpush.bf16.msra.mxu0 %v719
      %762 = vmatpush.bf16.msra.mxu0 %v718
      %763 = vmatmul.bf16.gmra.mxu0 %v609
      %v764 = vpop.f32.mrf.mxu0
      %v765 = vadd.f32 %v752, %v764
      %v766 = vpop.f32.mrf.mxu0
      %767 = vdwg.mxu0
      %v768 = vadd.f32 %v765, %v521
      %v769 = vsel %vm465, %v768, 0.0
      %770 = vadd.xlane.f32.xlu0 %v769
      %v771 = vpop.xlane.xlu0 %770
      %v772 = vmul.f32 %v771, %v492
      %v773 = vsub.f32 %v768, %v772
      %v774 = vmul.f32 %v773, %v773
      %v775 = vsel %vm465, %v774, 0.0
      %776 = vadd.xlane.f32.xlu0 %v775
      %v777 = vpop.xlane.xlu0 %776
      %v778 = vmul.f32 %v777, %v492
      %v779 = vadd.f32 %v778, 1e-05
      %v780 = vrsqrt.pop %v779
      %v781 = vmul.f32 %v780, %v779
      %v782 = vmul.f32 %v781, %v780
      %v783 = vmul.f32 0.5, %v782
      %v784 = vsub.f32 1.5, %v783
      %v785 = vmul.f32 %v780, %v784
      %vm786 = vweird.f32 %v779
      %vm787 = vweird.f32 %v780
      %vm788 = vmor %vm786, %vm787
      %v789 = vsel %vm788, %v780, %v785
      %v790 = vmul.f32 %v773, %v789
      %v791 = vld [vmem:[%s10] sm:$0x1]
      %v793 = vperm.slane %v791, 0
      %v795 = vmul.f32 %v790, %v793
      %v796 = vld [vmem:[%s11] sm:$0x1]
      %v798 = vperm.slane %v796, 0
      %v800 = vadd.f32 %v795, %v798
      %801 = vst.msk [vmem:[%s425] sm:$0xff] %vm465, %v800
      %p802 = scmp.lt.s32.totalorder %s23, 1
      %s803 = scalar_select %p802, %s23, 1
      %s804 = smul.addr %s803, 8
      %s805 = scalar_lea.vmem %s12, %s804
      // Predicated region
      $region69: #{transformer_forward.14} parent=67 // pred_check
        %p806 = pneg %p303
      $region70: #{transformer_forward.14} parent=67 // pred_check_branch
        %808 = sbr.rel (%p806) target = $region72
      $region71: #{transformer_forward.14} parent=67 // pred_region
        _
      $region72: #{transformer_forward.14} parent=67 // pred_fallthru
        _
    $region68: #{transformer_forward.14} parent=5 // pred_fallthru
      _
    %p809 = scmp.le.s32.totalorder 2, %s18
    // Predicated region
    $region73: #{transformer_forward.14} parent=5 // pred_check
      %p810 = pneg %p809
    $region74: #{transformer_forward.14} parent=5 // pred_check_branch
      %812 = sbr.rel (%p810) target = $region76
    $region75: #{transformer_forward.14} parent=5 // pred_region
      %s813 = ssub.s32 %s18, 2
      // Predicated region
      $region77: #{transformer_forward.14} parent=75 // pred_check
        %p814 = pneg %p309
      $region78: #{transformer_forward.14} parent=75 // pred_check_branch
        %816 = sbr.rel (%p814) target = $region80
      $region79: #{transformer_forward.14} parent=75 // pred_region
        %p817 = scmp.lt.s32.totalorder %s24, 1
        %s818 = scalar_select %p817, %s24, 1
        %s819 = smul.addr %s818, 8
        %s820 = scalar_lea.vmem %s12, %s819
      $region80: #{transformer_forward.14} parent=75 // pred_fallthru
        _
    $region76: #{transformer_forward.14} parent=5 // pred_fallthru
      _
  $region6: #{transformer_forward.14} parent=0 // loop_footer
    %s22 = sadd.s32 1, %s18
  $region7: #{transformer_forward.14} parent=0 // loop_footer_branch
    %17 = sbr.rel target = $region3
  $region8: #{transformer_forward.14} parent=0 // loop_exit
    _

// kernel: transformer_forward.13
$region0: #{transformer_forward.13}
  #allocation0 [shape = 'u32[]', space=smem, size = 0x4, offset = 0x4, fixed_abs, tag = 'smem constant byte address 0x4 - core index']
  #allocation1 [shape = 'u32[72,128]{1,0:T(1,128)}', space=vmem, size = 0x9000, scoped, tag = 'internal scratch']
  %s0 = inlined_call_operand.vmem [shape: f32[2,8,64], index: 0, kind: input, shape index: {}]
  %s1 = inlined_call_operand.vmem [shape: bf16[64,192], index: 1, kind: input, shape index: {}]
  %s2 = inlined_call_operand.vmem [shape: bf16[2,8,8,8], index: 2, kind: output, shape index: {}]
  %s3 = sld [smem:[#allocation0]]
  $region41: #{transformer_forward.13} parent=0
    _
  %s5 = ssub.s32 1, %s3
  %s6 = scalar_select 0, %s5, %s3
  loop: start=0, step=1, limit=4
  $region2: #{transformer_forward.13} parent=0 // loop_pre_header
    _
  $region3: #{transformer_forward.13} parent=0 // loop_header
    %s8 = sphi 0, %s12
    %p9 = scmp.ge.s32.totalorder %s8, 4
    %s18 = sphi 0, %s20
    %s21 = sphi 0, %s18
    %s22 = sphi 0, %s21
    %s38 = sphi 0, %s22
    %s42 = sphi 0, %s42
    %s44 = sphi 0, %s42
    %s45 = sphi 0, %s44
    %s59 = sphi 0, %s45
    %s65 = sphi 0, %s67
    %s68 = sphi 0, %s65
    %s69 = sphi 0, %s68
    %s85 = sphi 0, %s69
  $region4: #{transformer_forward.13} parent=0 // loop_header_branch
    %11 = sbr.rel (%p9) target = $region8
  $region5: #{transformer_forward.13} parent=0 // loop_body
    %s13 = ssub.s32 %s8, 1
    %s14 = ssub.s32 %s8, 2
    %s15 = sadd.s32 %s8, 1
    %s16 = ssub.s32 %s8, %s15
    %p17 = scmp.eq.s32.totalorder %s16, 0
    %s19 = sadd.s32 %s18, 1
    %s20 = scalar_select %p17, %s18, %s19
    %p23 = pneg %p17
    %p24 = scmp.eq.s32.totalorder %s8, 1
    %p25 = por %p23, %p24
    %p26 = scmp.ne.s32.totalorder %s18, %s21
    %p27 = scmp.eq.s32.totalorder %s8, 0
    %p28 = por %p26, %p27
    %p29 = scmp.ne.s32.totalorder %s18, %s21
    %p30 = scmp.eq.s32.totalorder %s13, 1
    %p31 = por %p29, %p30
    %p32 = scmp.ne.s32.totalorder %s21, %s22
    %p33 = scmp.eq.s32.totalorder %s13, 0
    %p34 = por %p32, %p33
    %p35 = scmp.ne.s32.totalorder %s21, %s22
    %p36 = scmp.eq.s32.totalorder %s14, 1
    %p37 = por %p35, %p36
    %p39 = scmp.ne.s32.totalorder %s22, %s38
    %p40 = scmp.eq.s32.totalorder %s14, 0
    %p41 = por %p39, %p40
    %s43 = sadd.s32 %s42, 1
    %p46 = scmp.eq.s32.totalorder %s8, 1
    %p47 = scmp.ne.s32.totalorder %s42, %s44
    %p48 = scmp.eq.s32.totalorder %s8, 0
    %p49 = por %p47, %p48
    %p50 = scmp.ne.s32.totalorder %s42, %s44
    %p51 = scmp.eq.s32.totalorder %s13, 1
    %p52 = por %p50, %p51
    %p53 = scmp.ne.s32.totalorder %s44, %s45
    %p54 = scmp.eq.s32.totalorder %s13, 0
    %p55 = por %p53, %p54
    %p56 = scmp.ne.s32.totalorder %s44, %s45
    %p57 = scmp.eq.s32.totalorder %s14, 1
    %p58 = por %p56, %p57
    %p60 = scmp.ne.s32.totalorder %s45, %s59
    %p61 = scmp.eq.s32.totalorder %s14, 0
    %p62 = por %p60, %p61
    %s63 = ssub.s32 %s8, %s15
    %p64 = scmp.eq.s32.totalorder %s63, 0
    %s66 = sadd.s32 %s65, 1
    %s67 = scalar_select %p64, %s65, %s66
    %p70 = pneg %p64
    %p71 = scmp.eq.s32.totalorder %s8, 1
    %p72 = por %p70, %p71
    %p73 = scmp.ne.s32.totalorder %s65, %s68
    %p74 = scmp.eq.s32.totalorder %s8, 0
    %p75 = por %p73, %p74
    %p76 = scmp.ne.s32.totalorder %s65, %s68
    %p77 = scmp.eq.s32.totalorder %s13, 1
    %p78 = por %p76, %p77
    %p79 = scmp.ne.s32.totalorder %s68, %s69
    %p80 = scmp.eq.s32.totalorder %s13, 0
    %p81 = por %p79, %p80
    %p82 = scmp.ne.s32.totalorder %s68, %s69
    %p83 = scmp.eq.s32.totalorder %s14, 1
    %p84 = por %p82, %p83
    %p86 = scmp.ne.s32.totalorder %s69, %s85
    %p87 = scmp.eq.s32.totalorder %s14, 0
    %p88 = por %p86, %p87
    %p89 = scmp.le.s32.totalorder 1, %s8
    %p90 = scmp.lt.s32.totalorder %s8, 3
    %p91 = pnand %p89, %p90
    %p92 = pneg %p91
    // Predicated region
    $region9: #{transformer_forward.13} parent=5 // pred_check
      _
    $region10: #{transformer_forward.13} parent=5 // pred_check_branch
      %94 = sbr.rel (%p91) target = $region12
    $region11: #{transformer_forward.13} parent=5 // pred_region
      %s95 = ssub.s32 %s8, 1
      // Predicated region
      $region13: #{transformer_forward.13} parent=11 // pred_check
        %p96 = pneg %p55
      $region14: #{transformer_forward.13} parent=11 // pred_check_branch
        %98 = sbr.rel (%p96) target = $region16
      $region15: #{transformer_forward.13} parent=11 // pred_region
        _
      $region16: #{transformer_forward.13} parent=11 // pred_fallthru
        _
    $region12: #{transformer_forward.13} parent=5 // pred_fallthru
      _
    %p99 = scmp.lt.s32.totalorder %s8, 2
    // Predicated region
    $region17: #{transformer_forward.13} parent=5 // pred_check
      %p100 = pneg %p99
    $region18: #{transformer_forward.13} parent=5 // pred_check_branch
      %102 = sbr.rel (%p100) target = $region20
    $region19: #{transformer_forward.13} parent=5 // pred_region
      // Predicated region
      $region21: #{transformer_forward.13} parent=19 // pred_check
        %p103 = pneg %p28
      $region22: #{transformer_forward.13} parent=19 // pred_check_branch
        %105 = sbr.rel (%p103) target = $region24
      $region23: #{transformer_forward.13} parent=19 // pred_region
        %p106 = scmp.lt.s32.totalorder %s8, 1
        %s107 = scalar_select %p106, %s8, 1
        %s108 = smul.addr %s107, 8
        %s109 = scalar_lea.vmem %s0, %s108
      $region24: #{transformer_forward.13} parent=19 // pred_fallthru
        _
    $region20: #{transformer_forward.13} parent=5 // pred_fallthru
      _
    %p110 = scmp.le.s32.totalorder 1, %s8
    %p111 = scmp.lt.s32.totalorder %s8, 3
    %p112 = pnand %p110, %p111
    %p113 = pneg %p112
    // Predicated region
    $region25: #{transformer_forward.13} parent=5 // pred_check
      _
    $region26: #{transformer_forward.13} parent=5 // pred_check_branch
      %115 = sbr.rel (%p112) target = $region28
    $region27: #{transformer_forward.13} parent=5 // pred_region
      %s116 = ssub.s32 %s8, 1
      %p117 = scmp.lt.s32.totalorder %s13, 1
      %s118 = scalar_select %p117, %s13, 1
      %s119 = smul.addr %s118, 8
      %s120 = scalar_lea.vmem %s0, %s119
      %p121 = pneg %p34
      %p122 = pneg %p31
      %p123 = pneg %p55
      %p124 = pneg %p52
      %p125 = pneg %p81
      %p126 = pneg %p78
      %p127 = scmp.lt.s32.totalorder %s13, 1
      %s128 = scalar_select %p127, %s13, 1
      %s129 = smul.addr %s128, 8
      %s130 = smul.addr %s129, 4
      %s131 = scalar_lea.vmem %s2, %s130
      %p132 = scmp.lt.s32.totalorder %s13, 1
      %s133 = scalar_select %p132, %s13, 1
      %s134 = smul.addr %s133, 8
      %s135 = scalar_lea.vmem %s0, %s134
      %p136 = scmp.lt.s32.totalorder %s13, 1
      %s137 = scalar_select %p136, %s13, 1
      %s138 = smul.addr %s137, 8
      %s139 = smul.addr %s138, 4
      %s140 = scalar_lea.vmem %s2, %s139
      %v142 = vld [vmem:[%s135] sm:$0xff]
      %v143 = vpack.c.bf16 %v142, %v142
      %v144 = vld [vmem:[%s1] sm:$0xff]
      %v145 = vld [vmem:[%s1 + $0x8] sm:$0xff]
      %v146 = vld [vmem:[%s1 + $0x10] sm:$0xff]
      %v147 = vld [vmem:[%s1 + $0x18] sm:$0xff]
      %v148 = vld [vmem:[%s1 + $0x20] sm:$0xff]
      %v149 = vld [vmem:[%s1 + $0x28] sm:$0xff]
      %v150 = vld [vmem:[%s1 + $0x30] sm:$0xff]
      %v151 = vld [vmem:[%s1 + $0x38] sm:$0xff]
      %v160 = vunpack.c.l.b16 %v144
      %v161 = vunpack.c.h.b16 %v144
      %v162 = vunpack.c.l.b16 %v145
      %v163 = vunpack.c.h.b16 %v145
      %v164 = vunpack.c.l.b16 %v146
      %v165 = vunpack.c.h.b16 %v146
      %v166 = vunpack.c.l.b16 %v147
      %v167 = vunpack.c.h.b16 %v147
      %v168 = vunpack.c.l.b16 %v148
      %v169 = vunpack.c.h.b16 %v148
      %v170 = vunpack.c.l.b16 %v149
      %v171 = vunpack.c.h.b16 %v149
      %v172 = vunpack.c.l.b16 %v150
      %v173 = vunpack.c.h.b16 %v150
      %v174 = vunpack.c.l.b16 %v151
      %v175 = vunpack.c.h.b16 %v151
      %v176 = vpack.c.b16 %v162, %v160
      %v177 = vpack.c.b16 %v163, %v161
      %v178 = vpack.c.b16 %v166, %v164
      %v179 = vpack.c.b16 %v167, %v165
      %v180 = vpack.c.b16 %v170, %v168
      %v181 = vpack.c.b16 %v171, %v169
      %v182 = vpack.c.b16 %v174, %v172
      %v183 = vpack.c.b16 %v175, %v173
      %vm192 = vcmask 523264
      %v194 = vsel %vm192, %v143, 0
      %196 = vmatpush.bf16.msra.mxu0 0
      %197 = vmatpush.bf16.msra.mxu0 0
      %198 = vmatpush.bf16.msra.mxu0 0
      %199 = vmatpush.bf16.msra.mxu0 0
      %200 = vmatpush.bf16.msra.mxu0 %v182
      %201 = vmatpush.bf16.msra.mxu0 %v180
      %202 = vmatpush.bf16.msra.mxu0 %v178
      %203 = vmatpush.bf16.msra.mxu0 %v176
      %204 = vmatmul.bf16.gmra.mxu0 %v194
      %v205 = vpop.f32.mrf.mxu0
      %v206 = vadd.f32 0.0, %v205
      %v207 = vpop.f32.mrf.mxu0
      %208 = vdwg.mxu0
      %209 = vmatpush.bf16.msra.mxu0 0
      %210 = vmatpush.bf16.msra.mxu0 0
      %211 = vmatpush.bf16.msra.mxu0 0
      %212 = vmatpush.bf16.msra.mxu0 0
      %213 = vmatpush.bf16.msra.mxu0 %v183
      %214 = vmatpush.bf16.msra.mxu0 %v181
      %215 = vmatpush.bf16.msra.mxu0 %v179
      %216 = vmatpush.bf16.msra.mxu0 %v177
      %217 = vmatmul.bf16.gmra.mxu0 %v194
      %v218 = vpop.f32.mrf.mxu0
      %v219 = vadd.f32 0.0, %v218
      %v220 = vpop.f32.mrf.mxu0
      %221 = vdwg.mxu0
      %v222 = vmul.f32 %v206, 0.35355338
      %v223 = vpack.c.bf16 %v222, %v222
      %v224 = vpack.c.bf16 %v206, %v206
      %v225 = vpack.c.bf16 %v219, %v219
      %v227 = vunpack.c.l.b16 %v224
      %v228 = vpack.c.b16 %v227, %v227
      %229 = vrot.lane.b32.xlu0 %v228, 64
      %v230 = vpop.permute.xlu0 %229
      %vm231 = vcmask 64512
      %v233 = vsel %vm231, %v223, 0
      %v236 = vsel %vm231, %v230, 0
      %238 = vmatpush.bf16.xpose.msra.mxu0 0
      %239 = vmatpush.bf16.xpose.msra.mxu0 0
      %240 = vmatpush.bf16.xpose.msra.mxu0 0
      %241 = vmatpush.bf16.xpose.msra.mxu0 0
      %242 = vmatpush.bf16.xpose.msra.mxu0 0
      %243 = vmatpush.bf16.xpose.msra.mxu0 0
      %244 = vmatpush.bf16.xpose.msra.mxu0 0
      %245 = vmatpush.bf16.xpose.msra.mxu0 %v236
      %246 = vmatmul.bf16.gmra.mxu0 %v233
      %v247 = vpop.f32.mrf.mxu0
      %v248 = vadd.f32 0.0, %v247
      %v249 = vpop.f32.mrf.mxu0
      %250 = vdwg.mxu0
      %v251 = vsel %vm231, %v248, -inf
      %252 = vmax.xlane.f32.xlu0 %v251
      %v253 = vpop.xlane.xlu0 %252
      %v254 = vsub.f32 %v248, %v253
      %v255 = vmul.f32 %v254, 1.442695
      %v256 = vpow.pop %v255
      %v257 = vsel %vm231, %v256, 0.0
      %258 = vadd.xlane.f32.xlu0 %v257
      %v259 = vpop.xlane.xlu0 %258
      %v260 = vrcp.pop %v259
      %v261 = vmul.f32 %v256, %v260
      %v262 = vpack.c.bf16 %v261, %v261
      %v264 = vsel %vm231, %v262, 0
      %vm266 = vcmask 1043456
      %v268 = vsel %vm266, %v225, 0
      %270 = vmatpush.bf16.msra.mxu0 0
      %271 = vmatpush.bf16.msra.mxu0 0
      %272 = vmatpush.bf16.msra.mxu0 0
      %273 = vmatpush.bf16.msra.mxu0 0
      %274 = vmatpush.bf16.msra.mxu0 0
      %275 = vmatpush.bf16.msra.mxu0 0
      %276 = vmatpush.bf16.msra.mxu0 0
      %277 = vmatpush.bf16.msra.mxu0 %v268
      %278 = vmatmul.bf16.gmra.mxu0 %v264
      %v279 = vpop.f32.mrf.mxu0
      %v280 = vadd.f32 0.0, %v279
      %v281 = vpop.f32.mrf.mxu0
      %282 = vdwg.mxu0
      %v283 = vpack.c.bf16 %v280, %v280
      %vm284 = vcmask 60416
      %285 = vst.msk [vmem:[%s140] sm:$0xf] %vm284, %v283
      %v287 = vunpack.c.l.b16 %v223
      %v288 = vpack.c.b16 %v287, %v287
      %289 = vrot.lane.b32.xlu0 %v288, 120
      %v290 = vpop.permute.xlu0 %289
      %291 = vrot.lane.b32.xlu0 %v228, 56
      %v292 = vpop.permute.xlu0 %291
      %v294 = vsel %vm231, %v290, 0
      %v297 = vsel %vm231, %v292, 0
      %299 = vmatpush.bf16.xpose.msra.mxu0 0
      %300 = vmatpush.bf16.xpose.msra.mxu0 0
      %301 = vmatpush.bf16.xpose.msra.mxu0 0
      %302 = vmatpush.bf16.xpose.msra.mxu0 0
      %303 = vmatpush.bf16.xpose.msra.mxu0 0
      %304 = vmatpush.bf16.xpose.msra.mxu0 0
      %305 = vmatpush.bf16.xpose.msra.mxu0 0
      %306 = vmatpush.bf16.xpose.msra.mxu0 %v297
      %307 = vmatmul.bf16.gmra.mxu0 %v294
      %v308 = vpop.f32.mrf.mxu0
      %v309 = vadd.f32 0.0, %v308
      %v310 = vpop.f32.mrf.mxu0
      %311 = vdwg.mxu0
      %v312 = vsel %vm231, %v309, -inf
      %313 = vmax.xlane.f32.xlu0 %v312
      %v314 = vpop.xlane.xlu0 %313
      %v315 = vsub.f32 %v309, %v314
      %v316 = vmul.f32 %v315, 1.442695
      %v317 = vpow.pop %v316
      %v318 = vsel %vm231, %v317, 0.0
      %319 = vadd.xlane.f32.xlu0 %v318
      %v320 = vpop.xlane.xlu0 %319
      %v321 = vrcp.pop %v320
      %v322 = vmul.f32 %v317, %v321
      %v323 = vpack.c.bf16 %v322, %v322
      %v325 = vunpack.c.l.b16 %v225
      %v326 = vpack.c.b16 %v325, %v325
      %327 = vrot.lane.b32.xlu0 %v326, 120
      %v328 = vpop.permute.xlu0 %327
      %v330 = vsel %vm231, %v323, 0
      %v333 = vsel %vm266, %v328, 0
      %335 = vmatpush.bf16.msra.mxu0 0
      %336 = vmatpush.bf16.msra.mxu0 0
      %337 = vmatpush.bf16.msra.mxu0 0
      %338 = vmatpush.bf16.msra.mxu0 0
      %339 = vmatpush.bf16.msra.mxu0 0
      %340 = vmatpush.bf16.msra.mxu0 0
      %341 = vmatpush.bf16.msra.mxu0 0
      %342 = vmatpush.bf16.msra.mxu0 %v333
      %343 = vmatmul.bf16.gmra.mxu0 %v330
      %v344 = vpop.f32.mrf.mxu0
      %v345 = vadd.f32 0.0, %v344
      %v346 = vpop.f32.mrf.mxu0
      %347 = vdwg.mxu0
      %v348 = vpack.c.bf16 %v345, %v345
      %s349 = scalar_lea.vmem %s140, 4
      %350 = vst.msk [vmem:[%s349] sm:$0xf] %vm284, %v348
      %351 = vrot.lane.b32.xlu0 %v288, 112
      %v352 = vpop.permute.xlu0 %351
      %353 = vrot.lane.b32.xlu0 %v228, 48
      %v354 = vpop.permute.xlu0 %353
      %v356 = vsel %vm231, %v352, 0
      %v359 = vsel %vm231, %v354, 0
      %361 = vmatpush.bf16.xpose.msra.mxu0 0
      %362 = vmatpush.bf16.xpose.msra.mxu0 0
      %363 = vmatpush.bf16.xpose.msra.mxu0 0
      %364 = vmatpush.bf16.xpose.msra.mxu0 0
      %365 = vmatpush.bf16.xpose.msra.mxu0 0
      %366 = vmatpush.bf16.xpose.msra.mxu0 0
      %367 = vmatpush.bf16.xpose.msra.mxu0 0
      %368 = vmatpush.bf16.xpose.msra.mxu0 %v359
      %369 = vmatmul.bf16.gmra.mxu0 %v356
      %v370 = vpop.f32.mrf.mxu0
      %v371 = vadd.f32 0.0, %v370
      %v372 = vpop.f32.mrf.mxu0
      %373 = vdwg.mxu0
      %v374 = vsel %vm231, %v371, -inf
      %375 = vmax.xlane.f32.xlu0 %v374
      %v376 = vpop.xlane.xlu0 %375
      %v377 = vsub.f32 %v371, %v376
      %v378 = vmul.f32 %v377, 1.442695
      %v379 = vpow.pop %v378
      %v380 = vsel %vm231, %v379, 0.0
      %381 = vadd.xlane.f32.xlu0 %v380
      %v382 = vpop.xlane.xlu0 %381
      %v383 = vrcp.pop %v382
      %v384 = vmul.f32 %v379, %v383
      %v385 = vpack.c.bf16 %v384, %v384
      %386 = vrot.lane.b32.xlu0 %v326, 112
      %v387 = vpop.permute.xlu0 %386
      %v389 = vsel %vm231, %v385, 0
      %v392 = vsel %vm266, %v387, 0
      %394 = vmatpush.bf16.msra.mxu0 0
      %395 = vmatpush.bf16.msra.mxu0 0
      %396 = vmatpush.bf16.msra.mxu0 0
      %397 = vmatpush.bf16.msra.mxu0 0
      %398 = vmatpush.bf16.msra.mxu0 0
      %399 = vmatpush.bf16.msra.mxu0 0
      %400 = vmatpush.bf16.msra.mxu0 0
      %401 = vmatpush.bf16.msra.mxu0 %v392
      %402 = vmatmul.bf16.gmra.mxu0 %v389
      %v403 = vpop.f32.mrf.mxu0
      %v404 = vadd.f32 0.0, %v403
      %v405 = vpop.f32.mrf.mxu0
      %406 = vdwg.mxu0
      %v407 = vpack.c.bf16 %v404, %v404
      %s408 = scalar_lea.vmem %s140, 8
      %409 = vst.msk [vmem:[%s408] sm:$0xf] %vm284, %v407
      %410 = vrot.lane.b32.xlu0 %v288, 104
      %v411 = vpop.permute.xlu0 %410
      %412 = vrot.lane.b32.xlu0 %v228, 40
      %v413 = vpop.permute.xlu0 %412
      %v415 = vsel %vm231, %v411, 0
      %v418 = vsel %vm231, %v413, 0
      %420 = vmatpush.bf16.xpose.msra.mxu0 0
      %421 = vmatpush.bf16.xpose.msra.mxu0 0
      %422 = vmatpush.bf16.xpose.msra.mxu0 0
      %423 = vmatpush.bf16.xpose.msra.mxu0 0
      %424 = vmatpush.bf16.xpose.msra.mxu0 0
      %425 = vmatpush.bf16.xpose.msra.mxu0 0
      %426 = vmatpush.bf16.xpose.msra.mxu0 0
      %427 = vmatpush.bf16.xpose.msra.mxu0 %v418
      %428 = vmatmul.bf16.gmra.mxu0 %v415
      %v429 = vpop.f32.mrf.mxu0
      %v430 = vadd.f32 0.0, %v429
      %v431 = vpop.f32.mrf.mxu0
      %432 = vdwg.mxu0
      %v433 = vsel %vm231, %v430, -inf
      %434 = vmax.xlane.f32.xlu0 %v433
      %v435 = vpop.xlane.xlu0 %434
      %v436 = vsub.f32 %v430, %v435
      %v437 = vmul.f32 %v436, 1.442695
      %v438 = vpow.pop %v437
      %v439 = vsel %vm231, %v438, 0.0
      %440 = vadd.xlane.f32.xlu0 %v439
      %v441 = vpop.xlane.xlu0 %440
      %v442 = vrcp.pop %v441
      %v443 = vmul.f32 %v438, %v442
      %v444 = vpack.c.bf16 %v443, %v443
      %445 = vrot.lane.b32.xlu0 %v326, 104
      %v446 = vpop.permute.xlu0 %445
      %v448 = vsel %vm231, %v444, 0
      %v451 = vsel %vm266, %v446, 0
      %453 = vmatpush.bf16.msra.mxu0 0
      %454 = vmatpush.bf16.msra.mxu0 0
      %455 = vmatpush.bf16.msra.mxu0 0
      %456 = vmatpush.bf16.msra.mxu0 0
      %457 = vmatpush.bf16.msra.mxu0 0
      %458 = vmatpush.bf16.msra.mxu0 0
      %459 = vmatpush.bf16.msra.mxu0 0
      %460 = vmatpush.bf16.msra.mxu0 %v451
      %461 = vmatmul.bf16.gmra.mxu0 %v448
      %v462 = vpop.f32.mrf.mxu0
      %v463 = vadd.f32 0.0, %v462
      %v464 = vpop.f32.mrf.mxu0
      %465 = vdwg.mxu0
      %v466 = vpack.c.bf16 %v463, %v463
      %s467 = scalar_lea.vmem %s140, 12
      %468 = vst.msk [vmem:[%s467] sm:$0xf] %vm284, %v466
      %469 = vrot.lane.b32.xlu0 %v288, 96
      %v470 = vpop.permute.xlu0 %469
      %471 = vrot.lane.b32.xlu0 %v228, 32
      %v472 = vpop.permute.xlu0 %471
      %v474 = vsel %vm231, %v470, 0
      %v477 = vsel %vm231, %v472, 0
      %479 = vmatpush.bf16.xpose.msra.mxu0 0
      %480 = vmatpush.bf16.xpose.msra.mxu0 0
      %481 = vmatpush.bf16.xpose.msra.mxu0 0
      %482 = vmatpush.bf16.xpose.msra.mxu0 0
      %483 = vmatpush.bf16.xpose.msra.mxu0 0
      %484 = vmatpush.bf16.xpose.msra.mxu0 0
      %485 = vmatpush.bf16.xpose.msra.mxu0 0
      %486 = vmatpush.bf16.xpose.msra.mxu0 %v477
      %487 = vmatmul.bf16.gmra.mxu0 %v474
      %v488 = vpop.f32.mrf.mxu0
      %v489 = vadd.f32 0.0, %v488
      %v490 = vpop.f32.mrf.mxu0
      %491 = vdwg.mxu0
      %v492 = vsel %vm231, %v489, -inf
      %493 = vmax.xlane.f32.xlu0 %v492
      %v494 = vpop.xlane.xlu0 %493
      %v495 = vsub.f32 %v489, %v494
      %v496 = vmul.f32 %v495, 1.442695
      %v497 = vpow.pop %v496
      %v498 = vsel %vm231, %v497, 0.0
      %499 = vadd.xlane.f32.xlu0 %v498
      %v500 = vpop.xlane.xlu0 %499
      %v501 = vrcp.pop %v500
      %v502 = vmul.f32 %v497, %v501
      %v503 = vpack.c.bf16 %v502, %v502
      %504 = vrot.lane.b32.xlu0 %v326, 96
      %v505 = vpop.permute.xlu0 %504
      %v507 = vsel %vm231, %v503, 0
      %v510 = vsel %vm266, %v505, 0
      %512 = vmatpush.bf16.msra.mxu0 0
      %513 = vmatpush.bf16.msra.mxu0 0
      %514 = vmatpush.bf16.msra.mxu0 0
      %515 = vmatpush.bf16.msra.mxu0 0
      %516 = vmatpush.bf16.msra.mxu0 0
      %517 = vmatpush.bf16.msra.mxu0 0
      %518 = vmatpush.bf16.msra.mxu0 0
      %519 = vmatpush.bf16.msra.mxu0 %v510
      %520 = vmatmul.bf16.gmra.mxu0 %v507
      %v521 = vpop.f32.mrf.mxu0
      %v522 = vadd.f32 0.0, %v521
      %v523 = vpop.f32.mrf.mxu0
      %524 = vdwg.mxu0
      %v525 = vpack.c.bf16 %v522, %v522
      %s526 = scalar_lea.vmem %s140, 16
      %527 = vst.msk [vmem:[%s526] sm:$0xf] %vm284, %v525
      %528 = vrot.lane.b32.xlu0 %v288, 88
      %v529 = vpop.permute.xlu0 %528
      %530 = vrot.lane.b32.xlu0 %v228, 24
      %v531 = vpop.permute.xlu0 %530
      %v533 = vsel %vm231, %v529, 0
      %v536 = vsel %vm231, %v531, 0
      %538 = vmatpush.bf16.xpose.msra.mxu0 0
      %539 = vmatpush.bf16.xpose.msra.mxu0 0
      %540 = vmatpush.bf16.xpose.msra.mxu0 0
      %541 = vmatpush.bf16.xpose.msra.mxu0 0
      %542 = vmatpush.bf16.xpose.msra.mxu0 0
      %543 = vmatpush.bf16.xpose.msra.mxu0 0
      %544 = vmatpush.bf16.xpose.msra.mxu0 0
      %545 = vmatpush.bf16.xpose.msra.mxu0 %v536
      %546 = vmatmul.bf16.gmra.mxu0 %v533
      %v547 = vpop.f32.mrf.mxu0
      %v548 = vadd.f32 0.0, %v547
      %v549 = vpop.f32.mrf.mxu0
      %550 = vdwg.mxu0
      %v551 = vsel %vm231, %v548, -inf
      %552 = vmax.xlane.f32.xlu0 %v551
      %v553 = vpop.xlane.xlu0 %552
      %v554 = vsub.f32 %v548, %v553
      %v555 = vmul.f32 %v554, 1.442695
      %v556 = vpow.pop %v555
      %v557 = vsel %vm231, %v556, 0.0
      %558 = vadd.xlane.f32.xlu0 %v557
      %v559 = vpop.xlane.xlu0 %558
      %v560 = vrcp.pop %v559
      %v561 = vmul.f32 %v556, %v560
      %v562 = vpack.c.bf16 %v561, %v561
      %563 = vrot.lane.b32.xlu0 %v326, 88
      %v564 = vpop.permute.xlu0 %563
      %v566 = vsel %vm231, %v562, 0
      %v569 = vsel %vm266, %v564, 0
      %571 = vmatpush.bf16.msra.mxu0 0
      %572 = vmatpush.bf16.msra.mxu0 0
      %573 = vmatpush.bf16.msra.mxu0 0
      %574 = vmatpush.bf16.msra.mxu0 0
      %575 = vmatpush.bf16.msra.mxu0 0
      %576 = vmatpush.bf16.msra.mxu0 0
      %577 = vmatpush.bf16.msra.mxu0 0
      %578 = vmatpush.bf16.msra.mxu0 %v569
      %579 = vmatmul.bf16.gmra.mxu0 %v566
      %v580 = vpop.f32.mrf.mxu0
      %v581 = vadd.f32 0.0, %v580
      %v582 = vpop.f32.mrf.mxu0
      %583 = vdwg.mxu0
      %v584 = vpack.c.bf16 %v581, %v581
      %s585 = scalar_lea.vmem %s140, 20
      %586 = vst.msk [vmem:[%s585] sm:$0xf] %vm284, %v584
      %587 = vrot.lane.b32.xlu0 %v288, 80
      %v588 = vpop.permute.xlu0 %587
      %589 = vrot.lane.b32.xlu0 %v228, 16
      %v590 = vpop.permute.xlu0 %589
      %v592 = vsel %vm231, %v588, 0
      %v595 = vsel %vm231, %v590, 0
      %597 = vmatpush.bf16.xpose.msra.mxu0 0
      %598 = vmatpush.bf16.xpose.msra.mxu0 0
      %599 = vmatpush.bf16.xpose.msra.mxu0 0
      %600 = vmatpush.bf16.xpose.msra.mxu0 0
      %601 = vmatpush.bf16.xpose.msra.mxu0 0
      %602 = vmatpush.bf16.xpose.msra.mxu0 0
      %603 = vmatpush.bf16.xpose.msra.mxu0 0
      %604 = vmatpush.bf16.xpose.msra.mxu0 %v595
      %605 = vmatmul.bf16.gmra.mxu0 %v592
      %v606 = vpop.f32.mrf.mxu0
      %v607 = vadd.f32 0.0, %v606
      %v608 = vpop.f32.mrf.mxu0
      %609 = vdwg.mxu0
      %v610 = vsel %vm231, %v607, -inf
      %611 = vmax.xlane.f32.xlu0 %v610
      %v612 = vpop.xlane.xlu0 %611
      %v613 = vsub.f32 %v607, %v612
      %v614 = vmul.f32 %v613, 1.442695
      %v615 = vpow.pop %v614
      %v616 = vsel %vm231, %v615, 0.0
      %617 = vadd.xlane.f32.xlu0 %v616
      %v618 = vpop.xlane.xlu0 %617
      %v619 = vrcp.pop %v618
      %v620 = vmul.f32 %v615, %v619
      %v621 = vpack.c.bf16 %v620, %v620
      %622 = vrot.lane.b32.xlu0 %v326, 80
      %v623 = vpop.permute.xlu0 %622
      %v625 = vsel %vm231, %v621, 0
      %v628 = vsel %vm266, %v623, 0
      %630 = vmatpush.bf16.msra.mxu0 0
      %631 = vmatpush.bf16.msra.mxu0 0
      %632 = vmatpush.bf16.msra.mxu0 0
      %633 = vmatpush.bf16.msra.mxu0 0
      %634 = vmatpush.bf16.msra.mxu0 0
      %635 = vmatpush.bf16.msra.mxu0 0
      %636 = vmatpush.bf16.msra.mxu0 0
      %637 = vmatpush.bf16.msra.mxu0 %v628
      %638 = vmatmul.bf16.gmra.mxu0 %v625
      %v639 = vpop.f32.mrf.mxu0
      %v640 = vadd.f32 0.0, %v639
      %v641 = vpop.f32.mrf.mxu0
      %642 = vdwg.mxu0
      %v643 = vpack.c.bf16 %v640, %v640
      %s644 = scalar_lea.vmem %s140, 24
      %645 = vst.msk [vmem:[%s644] sm:$0xf] %vm284, %v643
      %646 = vrot.lane.b32.xlu0 %v288, 72
      %v647 = vpop.permute.xlu0 %646
      %648 = vrot.lane.b32.xlu0 %v228, 8
      %v649 = vpop.permute.xlu0 %648
      %v651 = vsel %vm231, %v647, 0
      %v654 = vsel %vm231, %v649, 0
      %656 = vmatpush.bf16.xpose.msra.mxu0 0
      %657 = vmatpush.bf16.xpose.msra.mxu0 0
      %658 = vmatpush.bf16.xpose.msra.mxu0 0
      %659 = vmatpush.bf16.xpose.msra.mxu0 0
      %660 = vmatpush.bf16.xpose.msra.mxu0 0
      %661 = vmatpush.bf16.xpose.msra.mxu0 0
      %662 = vmatpush.bf16.xpose.msra.mxu0 0
      %663 = vmatpush.bf16.xpose.msra.mxu0 %v654
      %664 = vmatmul.bf16.gmra.mxu0 %v651
      %v665 = vpop.f32.mrf.mxu0
      %v666 = vadd.f32 0.0, %v665
      %v667 = vpop.f32.mrf.mxu0
      %668 = vdwg.mxu0
      %v669 = vsel %vm231, %v666, -inf
      %670 = vmax.xlane.f32.xlu0 %v669
      %v671 = vpop.xlane.xlu0 %670
      %v672 = vsub.f32 %v666, %v671
      %v673 = vmul.f32 %v672, 1.442695
      %v674 = vpow.pop %v673
      %v675 = vsel %vm231, %v674, 0.0
      %676 = vadd.xlane.f32.xlu0 %v675
      %v677 = vpop.xlane.xlu0 %676
      %v678 = vrcp.pop %v677
      %v679 = vmul.f32 %v674, %v678
      %v680 = vpack.c.bf16 %v679, %v679
      %681 = vrot.lane.b32.xlu0 %v326, 72
      %v682 = vpop.permute.xlu0 %681
      %v684 = vsel %vm231, %v680, 0
      %v687 = vsel %vm266, %v682, 0
      %689 = vmatpush.bf16.msra.mxu0 0
      %690 = vmatpush.bf16.msra.mxu0 0
      %691 = vmatpush.bf16.msra.mxu0 0
      %692 = vmatpush.bf16.msra.mxu0 0
      %693 = vmatpush.bf16.msra.mxu0 0
      %694 = vmatpush.bf16.msra.mxu0 0
      %695 = vmatpush.bf16.msra.mxu0 0
      %696 = vmatpush.bf16.msra.mxu0 %v687
      %697 = vmatmul.bf16.gmra.mxu0 %v684
      %v698 = vpop.f32.mrf.mxu0
      %v699 = vadd.f32 0.0, %v698
      %v700 = vpop.f32.mrf.mxu0
      %701 = vdwg.mxu0
      %v702 = vpack.c.bf16 %v699, %v699
      %s703 = scalar_lea.vmem %s140, 28
      %704 = vst.msk [vmem:[%s703] sm:$0xf] %vm284, %v702
      %p705 = scmp.lt.s32.totalorder %s13, 1
      %s706 = scalar_select %p705, %s13, 1
      %s707 = smul.addr %s706, 8
      %s708 = smul.addr %s707, 4
      %s709 = scalar_lea.vmem %s2, %s708
      // Predicated region
      $region29: #{transformer_forward.13} parent=27 // pred_check
        %p710 = pneg %p78
      $region30: #{transformer_forward.13} parent=27 // pred_check_branch
        %712 = sbr.rel (%p710) target = $region32
      $region31: #{transformer_forward.13} parent=27 // pred_region
        _
      $region32: #{transformer_forward.13} parent=27 // pred_fallthru
        _
    $region28: #{transformer_forward.13} parent=5 // pred_fallthru
      _
    %p713 = scmp.le.s32.totalorder 2, %s8
    // Predicated region
    $region33: #{transformer_forward.13} parent=5 // pred_check
      %p714 = pneg %p713
    $region34: #{transformer_forward.13} parent=5 // pred_check_branch
      %716 = sbr.rel (%p714) target = $region36
    $region35: #{transformer_forward.13} parent=5 // pred_region
      %s717 = ssub.s32 %s8, 2
      // Predicated region
      $region37: #{transformer_forward.13} parent=35 // pred_check
        %p718 = pneg %p84
      $region38: #{transformer_forward.13} parent=35 // pred_check_branch
        %720 = sbr.rel (%p718) target = $region40
      $region39: #{transformer_forward.13} parent=35 // pred_region
        %p721 = scmp.lt.s32.totalorder %s14, 1
        %s722 = scalar_select %p721, %s14, 1
        %s723 = smul.addr %s722, 8
        %s724 = smul.addr %s723, 4
        %s725 = scalar_lea.vmem %s2, %s724
      $region40: #{transformer_forward.13} parent=35 // pred_fallthru
        _
    $region36: #{transformer_forward.13} parent=5 // pred_fallthru
      _
  $region6: #{transformer_forward.13} parent=0 // loop_footer
    %s12 = sadd.s32 1, %s8
  $region7: #{transformer_forward.13} parent=0 // loop_footer_branch
    %7 = sbr.rel target = $region3
  $region8: #{transformer_forward.13} parent=0 // loop_exit
    _

</llo_original>
